<compile_context>
chip_gen: v7x
topology: tpu7x:2x2x1
jax: 0.10.0
libtpu: 0.0.40
codegen_flags: <defaults>
</compile_context>

<pallas_src>
import functools

import jax
import jax.numpy as jnp
from jax import lax
from jax.experimental import pallas as pl
from jax.experimental.pallas import tpu as pltpu


def encoder_layer_kernel(x_ref, wq_ref, wk_ref, wv_ref, wfc_ref,
                         fc1w_ref, fc1b_ref, fc2w_ref, fc2b_ref,
                         ln1g_ref, ln1b_ref, ln2g_ref, ln2b_ref,
                         o_ref, *, n_heads, dim_attn, eps=1e-5):
    Bt, S, D = x_ref.shape
    H, A = n_heads, dim_attn
    M = Bt * S

    x32 = x_ref[...].astype(jnp.float32).reshape(M, D)   # f32 slab for residual/LN math
    xbf = x32.astype(jnp.bfloat16)                        # bf16 operand for the MXU
    scale = 1.0 / (A ** 0.5)

    # ---- fused multi-head projections: one big matmul each for Q, K, V ----
    q_all = jnp.dot(xbf, wq_ref[...], preferred_element_type=jnp.float32) * scale
    k_all = jnp.dot(xbf, wk_ref[...], preferred_element_type=jnp.float32)
    v_all = jnp.dot(xbf, wv_ref[...], preferred_element_type=jnp.float32)
    q3 = q_all.reshape(Bt, S, H * A)
    k3 = k_all.reshape(Bt, S, H * A)
    v3 = v_all.reshape(Bt, S, H * D)

    # ---- attention per head; accumulate the output projection (no concat) ----
    # TODO(synk): for long sequence lengths, stream KV over an 'arbitrary' grid axis
    # (online softmax) instead of materializing the full (S, S) score matrix.
    acc = jnp.zeros((M, D), jnp.float32)
    for h in range(H):                                    # static unroll, H is small
        qh = q3[:, :, h * A:(h + 1) * A].astype(jnp.bfloat16)   # (Bt, S, A)
        kh = k3[:, :, h * A:(h + 1) * A].astype(jnp.bfloat16)   # (Bt, S, A)
        vh = v3[:, :, h * D:(h + 1) * D].astype(jnp.bfloat16)   # (Bt, S, D)
        # scores: contract the A axis directly (no explicit transpose of k)
        s = lax.dot_general(qh, kh, (((2,), (2,)), ((0,), (0,))),
                            preferred_element_type=jnp.float32)          # (Bt, S, S)
        s = s - jnp.max(s, axis=-1, keepdims=True)
        p = jnp.exp(s)
        p = p * pl.reciprocal(jnp.sum(p, axis=-1, keepdims=True), approx=True)
        oh = lax.dot_general(p.astype(jnp.bfloat16), vh, (((2,), (1,)), ((0,), (0,))),
                             preferred_element_type=jnp.float32)         # (Bt, S, D)
        acc = acc + jnp.dot(oh.reshape(M, D).astype(jnp.bfloat16),
                            wfc_ref[pl.ds(h * D, D), :],                 # head-major rows
                            preferred_element_type=jnp.float32)

    # ---- residual + LayerNorm 1 (f32) ----
    y = x32 + acc
    mu = jnp.mean(y, axis=-1, keepdims=True)
    var = jnp.mean((y - mu) ** 2, axis=-1, keepdims=True)
    y = (y - mu) * lax.rsqrt(var + eps) * ln1g_ref[0] + ln1b_ref[0]

    # ---- feed-forward: fc2(relu(fc1(y))) ----
    h1 = jnp.dot(y.astype(jnp.bfloat16), fc1w_ref[...],
                 preferred_element_type=jnp.float32) + fc1b_ref[0]
    h1 = jnp.maximum(h1, 0.0)
    h2 = jnp.dot(h1.astype(jnp.bfloat16), fc2w_ref[...],
                 preferred_element_type=jnp.float32) + fc2b_ref[0]

    # ---- residual + LayerNorm 2 (f32) ----
    z = y + h2
    mu2 = jnp.mean(z, axis=-1, keepdims=True)
    var2 = jnp.mean((z - mu2) ** 2, axis=-1, keepdims=True)
    z = (z - mu2) * lax.rsqrt(var2 + eps) * ln2g_ref[0] + ln2b_ref[0]

    o_ref[...] = z.reshape(Bt, S, D).astype(o_ref.dtype)


def encoder_layer(x, params, *, n_heads, dim_attn, block_b=None):
    B, S, D = x.shape
    H, A = n_heads, dim_attn
    F = params["fc1_w"].shape[1]

    # Rows per grid step: as many as possible while keeping >= 2 parallel grid
    # steps (v7x has 2 TensorCores to feed). B == 1 degenerates to a single step.
    if block_b is None:
        block_b = 1
        for d in range(1, max(B // 2, 1) + 1):
            if B % d == 0:
                block_b = d
    assert B % block_b == 0
    grid = (B // block_b,)

    bf16 = jnp.bfloat16
    wq = params["wq"].astype(bf16)        # (D, H*A)  fused heads
    wk = params["wk"].astype(bf16)        # (D, H*A)
    wv = params["wv"].astype(bf16)        # (D, H*D)
    wfc = params["w_fc"].astype(bf16)     # (H*D, D)  head-major rows
    fc1w = params["fc1_w"].astype(bf16)   # (D, F)
    fc2w = params["fc2_w"].astype(bf16)   # (F, D)

    full = lambda shp: pl.BlockSpec(shp, lambda b: (0,) * len(shp))

    flops = B * (2 * S * D * (2 * H * A + H * D)       # q, k, v projections
                 + 2 * S * S * (H * A + H * D)         # scores + p @ v
                 + 2 * S * (H * D) * D                 # output projection
                 + 4 * S * D * F)                      # fc1 + fc2
    transcendentals = B * (H * S * S + H * S + 2 * S)  # exp + softmax recip + rsqrt
    bytes_accessed = (2 * B * S * D * 4                                   # x in + out (f32)
                      + 2 * (2 * D * H * A + 2 * H * D * D + 2 * D * F)   # bf16 weights
                      + 4 * (F + 5 * D))                                  # biases + LN params

    kernel = functools.partial(encoder_layer_kernel, n_heads=H, dim_attn=A)
    return pl.pallas_call(
        kernel,
        out_shape=jax.ShapeDtypeStruct((B, S, D), jnp.float32),
        grid_spec=pltpu.PrefetchScalarGridSpec(
            num_scalar_prefetch=0,
            grid=grid,
            in_specs=[
                pl.BlockSpec((block_b, S, D), lambda b: (b, 0, 0)),   # x (block_b rows/step)
                full((D, H * A)),    # Wq (heads fused along output dim)
                full((D, H * A)),    # Wk
                full((D, H * D)),    # Wv
                full((H * D, D)),    # W_fc (head-major rows)
                full((D, F)),        # fc1 weight (x @ W form)
                full((1, F)),        # fc1 bias (f32)
                full((F, D)),        # fc2 weight
                full((1, D)),        # fc2 bias (f32)
                full((1, D)),        # norm1 gamma
                full((1, D)),        # norm1 beta
                full((1, D)),        # norm2 gamma
                full((1, D)),        # norm2 beta
            ],
            out_specs=pl.BlockSpec((block_b, S, D), lambda b: (b, 0, 0)),
        ),
        compiler_params=pltpu.CompilerParams(
            dimension_semantics=("parallel",),
            vmem_limit_bytes=64 * 1024 * 1024),
        cost_estimate=pl.CostEstimate(
            flops=flops, transcendentals=transcendentals,
            bytes_accessed=bytes_accessed),
    )(x, wq, wk, wv, wfc, fc1w, params["fc1_b"], fc2w, params["fc2_b"],
      params["ln1_g"], params["ln1_b"], params["ln2_g"], params["ln2_b"])


def make_params(key, dim_val, dim_attn, dim_ff, n_heads):
    """Deterministic synthetic parameters (no checkpoint load)."""
    ks = jax.random.split(key, 8)
    D, A, F, H = dim_val, dim_attn, dim_ff, n_heads
    init = lambda k, shp: (jax.random.normal(k, shp, jnp.float32) * 0.1)

    # Per-head Q/K/V weights fused along the output dim, already transposed for x @ W.
    wq = init(ks[0], (D, H * A))
    wk = init(ks[1], (D, H * A))
    wv = init(ks[2], (D, H * D))

    # PyTorch fc = Linear(H*D, D, bias=False); its flattened input order is
    # index = d*H + h (stack(dim=-1) then flatten). The kernel accumulates heads
    # head-major (index = h*D + d), so permute the torch-layout weight.
    w_fc_torch = init(ks[3], (D, H * D))                      # (out, H*D) torch layout
    w_fc = jnp.transpose(w_fc_torch.reshape(D, D, H), (2, 1, 0)).reshape(H * D, D)

    fc1_w = init(ks[4], (D, F))
    fc1_b = init(ks[5], (1, F))
    fc2_w = init(ks[6], (F, D))
    fc2_b = init(ks[7], (1, D))

    return dict(
        wq=wq, wk=wk, wv=wv, w_fc=w_fc,
        fc1_w=fc1_w, fc1_b=fc1_b, fc2_w=fc2_w, fc2_b=fc2_b,
        ln1_g=jnp.ones((1, D), jnp.float32), ln1_b=jnp.zeros((1, D), jnp.float32),
        ln2_g=jnp.ones((1, D), jnp.float32), ln2_b=jnp.zeros((1, D), jnp.float32),
    )


def encoder_layer_ref(x, p, *, n_heads, dim_attn, eps=1e-5):
    """Pure-JAX f32 reference mirroring the PyTorch forward (eval mode)."""
    H, A = n_heads, dim_attn
    D = x.shape[-1]
    heads = []
    for h in range(H):
        q = x @ p["wq"][:, h * A:(h + 1) * A]
        k = x @ p["wk"][:, h * A:(h + 1) * A]
        v = x @ p["wv"][:, h * D:(h + 1) * D]
        s = (q @ jnp.swapaxes(k, -1, -2)) / jnp.sqrt(jnp.float32(A))
        heads.append(jax.nn.softmax(s, axis=-1) @ v)
    cat = jnp.concatenate(heads, axis=-1)                 # head-major, matches w_fc rows
    a = cat @ p["w_fc"]

    def ln(y, g, b):
        mu = jnp.mean(y, -1, keepdims=True)
        var = jnp.mean((y - mu) ** 2, -1, keepdims=True)
        return (y - mu) * lax.rsqrt(var + eps) * g[0] + b[0]

    y = ln(x + a, p["ln1_g"], p["ln1_b"])
    h1 = jnp.maximum(y @ p["fc1_w"] + p["fc1_b"][0], 0.0)
    h2 = h1 @ p["fc2_w"] + p["fc2_b"][0]
    return ln(y + h2, p["ln2_g"], p["ln2_b"])


if __name__ == "__main__":
    B, S = 2, 8
    dim_val, dim_attn, dim_ff, n_heads = 32, 32, 64, 2

    key = jax.random.PRNGKey(0)
    kx, kp = jax.random.split(key)
    x = jax.random.normal(kx, (B, S, dim_val), jnp.float32)
    params = make_params(kp, dim_val, dim_attn, dim_ff, n_heads)

    out = encoder_layer(x, params, n_heads=n_heads, dim_attn=dim_attn)
    out = jax.block_until_ready(out)

    ref = encoder_layer_ref(x, params, n_heads=n_heads, dim_attn=dim_attn)
    assert out.shape == (B, S, dim_val)
    # bf16 MXU inputs + approx-reciprocal softmax -> looser tolerance than pure f32.
    assert jnp.allclose(out, ref, atol=5e-2, rtol=5e-2), "mismatch vs JAX reference"
    print("KERNEL_OK")
</pallas_src>

<mosaic_0001>
module attributes {stable_mosaic.version = 11 : i64} {
  func.func @encoder_layer_kernel(%arg0: i32, %arg1: memref<1x8x32xf32, #tpu.memory_space<vmem>>, %arg2: memref<32x64xbf16, #tpu.memory_space<vmem>>, %arg3: memref<32x64xbf16, #tpu.memory_space<vmem>>, %arg4: memref<32x64xbf16, #tpu.memory_space<vmem>>, %arg5: memref<64x32xbf16, #tpu.memory_space<vmem>>, %arg6: memref<32x64xbf16, #tpu.memory_space<vmem>>, %arg7: memref<1x64xf32, #tpu.memory_space<vmem>>, %arg8: memref<64x32xbf16, #tpu.memory_space<vmem>>, %arg9: memref<1x32xf32, #tpu.memory_space<vmem>>, %arg10: memref<1x32xf32, #tpu.memory_space<vmem>>, %arg11: memref<1x32xf32, #tpu.memory_space<vmem>>, %arg12: memref<1x32xf32, #tpu.memory_space<vmem>>, %arg13: memref<1x32xf32, #tpu.memory_space<vmem>>, %arg14: memref<1x8x32xf32, #tpu.memory_space<vmem>>) attributes {dimension_semantics = [#tpu.dimension_semantics<parallel>], iteration_bounds = array<i64: 2>, scalar_prefetch = 0 : i64, scratch_operands = 0 : i64, tpu.core_type = #tpu.core_type<tc>, window_params = [{transform_indices = @transform_0, window_bounds = array<i64: 1, 8, 32>}, {pipeline_mode = #tpu.pipeline_mode<synchronous>, transform_indices = @transform_1, window_bounds = array<i64: 32, 64>}, {pipeline_mode = #tpu.pipeline_mode<synchronous>, transform_indices = @transform_2, window_bounds = array<i64: 32, 64>}, {pipeline_mode = #tpu.pipeline_mode<synchronous>, transform_indices = @transform_3, window_bounds = array<i64: 32, 64>}, {pipeline_mode = #tpu.pipeline_mode<synchronous>, transform_indices = @transform_4, window_bounds = array<i64: 64, 32>}, {pipeline_mode = #tpu.pipeline_mode<synchronous>, transform_indices = @transform_5, window_bounds = array<i64: 32, 64>}, {pipeline_mode = #tpu.pipeline_mode<synchronous>, transform_indices = @transform_6, window_bounds = array<i64: 1, 64>}, {pipeline_mode = #tpu.pipeline_mode<synchronous>, transform_indices = @transform_7, window_bounds = array<i64: 64, 32>}, {pipeline_mode = #tpu.pipeline_mode<synchronous>, transform_indices = @transform_8, window_bounds = array<i64: 1, 32>}, {pipeline_mode = #tpu.pipeline_mode<synchronous>, transform_indices = @transform_9, window_bounds = array<i64: 1, 32>}, {pipeline_mode = #tpu.pipeline_mode<synchronous>, transform_indices = @transform_10, window_bounds = array<i64: 1, 32>}, {pipeline_mode = #tpu.pipeline_mode<synchronous>, transform_indices = @transform_11, window_bounds = array<i64: 1, 32>}, {pipeline_mode = #tpu.pipeline_mode<synchronous>, transform_indices = @transform_12, window_bounds = array<i64: 1, 32>}, {transform_indices = @transform_13, window_bounds = array<i64: 1, 8, 32>}]} {
    %c0 = arith.constant 0 : index
    %c0_0 = arith.constant 0 : index
    %c0_1 = arith.constant 0 : index
    %0 = vector.load %arg1[%c0, %c0_0, %c0_1] : memref<1x8x32xf32, #tpu.memory_space<vmem>>, vector<1x8x32xf32>
    %1 = vector.shape_cast %0 : vector<1x8x32xf32> to vector<8x32xf32>
    %2 = arith.truncf %1 : vector<8x32xf32> to vector<8x32xbf16>
    %c0_2 = arith.constant 0 : index
    %c0_3 = arith.constant 0 : index
    %3 = vector.load %arg2[%c0_2, %c0_3] : memref<32x64xbf16, #tpu.memory_space<vmem>>, vector<32x64xbf16>
    %cst = arith.constant dense<0.000000e+00> : vector<8x64xf32>
    %4 = tpu.matmul %2, %3, %cst {dimension_numbers = #tpu.dot_dimension_numbers<[1], [0], [0], [1], [0, 0, 1, 1], [], []>} : vector<8x32xbf16>, vector<32x64xbf16>, vector<8x64xf32> -> vector<8x64xf32>
    %cst_4 = arith.constant 0.176776692 : f32
    %5 = vector.broadcast %cst_4 : f32 to vector<8x64xf32>
    %6 = arith.mulf %4, %5 : vector<8x64xf32>
    %c0_5 = arith.constant 0 : index
    %c0_6 = arith.constant 0 : index
    %7 = vector.load %arg3[%c0_5, %c0_6] : memref<32x64xbf16, #tpu.memory_space<vmem>>, vector<32x64xbf16>
    %cst_7 = arith.constant dense<0.000000e+00> : vector<8x64xf32>
    %8 = tpu.matmul %2, %7, %cst_7 {dimension_numbers = #tpu.dot_dimension_numbers<[1], [0], [0], [1], [0, 0, 1, 1], [], []>} : vector<8x32xbf16>, vector<32x64xbf16>, vector<8x64xf32> -> vector<8x64xf32>
    %c0_8 = arith.constant 0 : index
    %c0_9 = arith.constant 0 : index
    %9 = vector.load %arg4[%c0_8, %c0_9] : memref<32x64xbf16, #tpu.memory_space<vmem>>, vector<32x64xbf16>
    %cst_10 = arith.constant dense<0.000000e+00> : vector<8x64xf32>
    %10 = tpu.matmul %2, %9, %cst_10 {dimension_numbers = #tpu.dot_dimension_numbers<[1], [0], [0], [1], [0, 0, 1, 1], [], []>} : vector<8x32xbf16>, vector<32x64xbf16>, vector<8x64xf32> -> vector<8x64xf32>
    %11 = vector.shape_cast %6 : vector<8x64xf32> to vector<1x8x64xf32>
    %12 = vector.shape_cast %8 : vector<8x64xf32> to vector<1x8x64xf32>
    %13 = vector.shape_cast %10 : vector<8x64xf32> to vector<1x8x64xf32>
    %cst_11 = arith.constant 0.000000e+00 : f32
    %14 = vector.broadcast %cst_11 : f32 to vector<8x32xf32>
    %15 = vector.extract_strided_slice %11 {offsets = [0, 0, 0], sizes = [1, 8, 32], strides = [1, 1, 1]} : vector<1x8x64xf32> to vector<1x8x32xf32>
    %16 = arith.truncf %15 : vector<1x8x32xf32> to vector<1x8x32xbf16>
    %17 = vector.extract_strided_slice %12 {offsets = [0, 0, 0], sizes = [1, 8, 32], strides = [1, 1, 1]} : vector<1x8x64xf32> to vector<1x8x32xf32>
    %18 = arith.truncf %17 : vector<1x8x32xf32> to vector<1x8x32xbf16>
    %19 = vector.extract_strided_slice %13 {offsets = [0, 0, 0], sizes = [1, 8, 32], strides = [1, 1, 1]} : vector<1x8x64xf32> to vector<1x8x32xf32>
    %20 = arith.truncf %19 : vector<1x8x32xf32> to vector<1x8x32xbf16>
    %cst_12 = arith.constant dense<0.000000e+00> : vector<1x8x8xf32>
    %21 = tpu.matmul %16, %18, %cst_12 {dimension_numbers = #tpu.dot_dimension_numbers<[2], [2], [1], [1], [0, 0, 0, 1, 1, 1], [0], [0]>} : vector<1x8x32xbf16>, vector<1x8x32xbf16>, vector<1x8x8xf32> -> vector<1x8x8xf32>
    %cst_13 = arith.constant dense<0xFF800000> : vector<1x8xf32>
    %22 = vector.multi_reduction <maximumf>, %21, %cst_13 [2] : vector<1x8x8xf32> to vector<1x8xf32>
    %23 = vector.shape_cast %22 : vector<1x8xf32> to vector<1x8x1xf32>
    %24 = vector.broadcast %23 : vector<1x8x1xf32> to vector<1x8x8xf32>
    %25 = arith.subf %21, %24 : vector<1x8x8xf32>
    %26 = math.exp %25 : vector<1x8x8xf32>
    %cst_14 = arith.constant dense<0.000000e+00> : vector<1x8xf32>
    %27 = vector.multi_reduction <add>, %26, %cst_14 [2] : vector<1x8x8xf32> to vector<1x8xf32>
    %28 = vector.shape_cast %27 : vector<1x8xf32> to vector<1x8x1xf32>
    %29 = tpu.reciprocal %28 {approx = true} : vector<1x8x1xf32> -> vector<1x8x1xf32>
    %30 = vector.broadcast %29 : vector<1x8x1xf32> to vector<1x8x8xf32>
    %31 = arith.mulf %26, %30 : vector<1x8x8xf32>
    %32 = arith.truncf %31 : vector<1x8x8xf32> to vector<1x8x8xbf16>
    %cst_15 = arith.constant dense<0.000000e+00> : vector<1x8x32xf32>
    %33 = tpu.matmul %32, %20, %cst_15 {dimension_numbers = #tpu.dot_dimension_numbers<[2], [1], [1], [2], [0, 0, 0, 1, 1, 2], [0], [0]>} : vector<1x8x8xbf16>, vector<1x8x32xbf16>, vector<1x8x32xf32> -> vector<1x8x32xf32>
    %34 = vector.shape_cast %33 : vector<1x8x32xf32> to vector<8x32xf32>
    %35 = arith.truncf %34 : vector<8x32xf32> to vector<8x32xbf16>
    %c0_16 = arith.constant 0 : index
    %c0_17 = arith.constant 0 : index
    %36 = vector.load %arg5[%c0_16, %c0_17] : memref<64x32xbf16, #tpu.memory_space<vmem>>, vector<32x32xbf16>
    %cst_18 = arith.constant dense<0.000000e+00> : vector<8x32xf32>
    %37 = tpu.matmul %35, %36, %cst_18 {dimension_numbers = #tpu.dot_dimension_numbers<[1], [0], [0], [1], [0, 0, 1, 1], [], []>} : vector<8x32xbf16>, vector<32x32xbf16>, vector<8x32xf32> -> vector<8x32xf32>
    %38 = arith.addf %14, %37 : vector<8x32xf32>
    %39 = vector.extract_strided_slice %11 {offsets = [0, 0, 32], sizes = [1, 8, 32], strides = [1, 1, 1]} : vector<1x8x64xf32> to vector<1x8x32xf32>
    %40 = arith.truncf %39 : vector<1x8x32xf32> to vector<1x8x32xbf16>
    %41 = vector.extract_strided_slice %12 {offsets = [0, 0, 32], sizes = [1, 8, 32], strides = [1, 1, 1]} : vector<1x8x64xf32> to vector<1x8x32xf32>
    %42 = arith.truncf %41 : vector<1x8x32xf32> to vector<1x8x32xbf16>
    %43 = vector.extract_strided_slice %13 {offsets = [0, 0, 32], sizes = [1, 8, 32], strides = [1, 1, 1]} : vector<1x8x64xf32> to vector<1x8x32xf32>
    %44 = arith.truncf %43 : vector<1x8x32xf32> to vector<1x8x32xbf16>
    %cst_19 = arith.constant dense<0.000000e+00> : vector<1x8x8xf32>
    %45 = tpu.matmul %40, %42, %cst_19 {dimension_numbers = #tpu.dot_dimension_numbers<[2], [2], [1], [1], [0, 0, 0, 1, 1, 1], [0], [0]>} : vector<1x8x32xbf16>, vector<1x8x32xbf16>, vector<1x8x8xf32> -> vector<1x8x8xf32>
    %cst_20 = arith.constant dense<0xFF800000> : vector<1x8xf32>
    %46 = vector.multi_reduction <maximumf>, %45, %cst_20 [2] : vector<1x8x8xf32> to vector<1x8xf32>
    %47 = vector.shape_cast %46 : vector<1x8xf32> to vector<1x8x1xf32>
    %48 = vector.broadcast %47 : vector<1x8x1xf32> to vector<1x8x8xf32>
    %49 = arith.subf %45, %48 : vector<1x8x8xf32>
    %50 = math.exp %49 : vector<1x8x8xf32>
    %cst_21 = arith.constant dense<0.000000e+00> : vector<1x8xf32>
    %51 = vector.multi_reduction <add>, %50, %cst_21 [2] : vector<1x8x8xf32> to vector<1x8xf32>
    %52 = vector.shape_cast %51 : vector<1x8xf32> to vector<1x8x1xf32>
    %53 = tpu.reciprocal %52 {approx = true} : vector<1x8x1xf32> -> vector<1x8x1xf32>
    %54 = vector.broadcast %53 : vector<1x8x1xf32> to vector<1x8x8xf32>
    %55 = arith.mulf %50, %54 : vector<1x8x8xf32>
    %56 = arith.truncf %55 : vector<1x8x8xf32> to vector<1x8x8xbf16>
    %cst_22 = arith.constant dense<0.000000e+00> : vector<1x8x32xf32>
    %57 = tpu.matmul %56, %44, %cst_22 {dimension_numbers = #tpu.dot_dimension_numbers<[2], [1], [1], [2], [0, 0, 0, 1, 1, 2], [0], [0]>} : vector<1x8x8xbf16>, vector<1x8x32xbf16>, vector<1x8x32xf32> -> vector<1x8x32xf32>
    %58 = vector.shape_cast %57 : vector<1x8x32xf32> to vector<8x32xf32>
    %59 = arith.truncf %58 : vector<8x32xf32> to vector<8x32xbf16>
    %c32 = arith.constant 32 : index
    %c0_23 = arith.constant 0 : index
    %60 = vector.load %arg5[%c32, %c0_23] : memref<64x32xbf16, #tpu.memory_space<vmem>>, vector<32x32xbf16>
    %cst_24 = arith.constant dense<0.000000e+00> : vector<8x32xf32>
    %61 = tpu.matmul %59, %60, %cst_24 {dimension_numbers = #tpu.dot_dimension_numbers<[1], [0], [0], [1], [0, 0, 1, 1], [], []>} : vector<8x32xbf16>, vector<32x32xbf16>, vector<8x32xf32> -> vector<8x32xf32>
    %62 = arith.addf %38, %61 : vector<8x32xf32>
    %63 = arith.addf %1, %62 : vector<8x32xf32>
    %cst_25 = arith.constant dense<0.000000e+00> : vector<8xf32>
    %64 = vector.multi_reduction <add>, %63, %cst_25 [1] : vector<8x32xf32> to vector<8xf32>
    %65 = vector.shape_cast %64 : vector<8xf32> to vector<8x1xf32>
    %cst_26 = arith.constant 3.200000e+01 : f32
    %66 = vector.broadcast %cst_26 : f32 to vector<8x1xf32>
    %67 = arith.divf %65, %66 : vector<8x1xf32>
    %68 = vector.broadcast %67 : vector<8x1xf32> to vector<8x32xf32>
    %69 = arith.subf %63, %68 : vector<8x32xf32>
    %70 = arith.mulf %69, %69 : vector<8x32xf32>
    %cst_27 = arith.constant dense<0.000000e+00> : vector<8xf32>
    %71 = vector.multi_reduction <add>, %70, %cst_27 [1] : vector<8x32xf32> to vector<8xf32>
    %72 = vector.shape_cast %71 : vector<8xf32> to vector<8x1xf32>
    %cst_28 = arith.constant 3.200000e+01 : f32
    %73 = vector.broadcast %cst_28 : f32 to vector<8x1xf32>
    %74 = arith.divf %72, %73 : vector<8x1xf32>
    %75 = vector.broadcast %67 : vector<8x1xf32> to vector<8x32xf32>
    %76 = arith.subf %63, %75 : vector<8x32xf32>
    %cst_29 = arith.constant 9.99999974E-6 : f32
    %77 = vector.broadcast %cst_29 : f32 to vector<8x1xf32>
    %78 = arith.addf %74, %77 : vector<8x1xf32>
    %79 = math.rsqrt %78 : vector<8x1xf32>
    %80 = vector.broadcast %79 : vector<8x1xf32> to vector<8x32xf32>
    %81 = arith.mulf %76, %80 : vector<8x32xf32>
    %c0_30 = arith.constant 0 : index
    %c0_31 = arith.constant 0 : index
    %82 = vector.load %arg10[%c0_30, %c0_31] : memref<1x32xf32, #tpu.memory_space<vmem>>, vector<1x32xf32>
    %83 = vector.shape_cast %82 : vector<1x32xf32> to vector<32xf32>
    %84 = vector.shape_cast %83 : vector<32xf32> to vector<1x32xf32>
    %85 = vector.broadcast %84 : vector<1x32xf32> to vector<8x32xf32>
    %86 = arith.mulf %81, %85 : vector<8x32xf32>
    %c0_32 = arith.constant 0 : index
    %c0_33 = arith.constant 0 : index
    %87 = vector.load %arg11[%c0_32, %c0_33] : memref<1x32xf32, #tpu.memory_space<vmem>>, vector<1x32xf32>
    %88 = vector.shape_cast %87 : vector<1x32xf32> to vector<32xf32>
    %89 = vector.shape_cast %88 : vector<32xf32> to vector<1x32xf32>
    %90 = vector.broadcast %89 : vector<1x32xf32> to vector<8x32xf32>
    %91 = arith.addf %86, %90 : vector<8x32xf32>
    %92 = arith.truncf %91 : vector<8x32xf32> to vector<8x32xbf16>
    %c0_34 = arith.constant 0 : index
    %c0_35 = arith.constant 0 : index
    %93 = vector.load %arg6[%c0_34, %c0_35] : memref<32x64xbf16, #tpu.memory_space<vmem>>, vector<32x64xbf16>
    %cst_36 = arith.constant dense<0.000000e+00> : vector<8x64xf32>
    %94 = tpu.matmul %92, %93, %cst_36 {dimension_numbers = #tpu.dot_dimension_numbers<[1], [0], [0], [1], [0, 0, 1, 1], [], []>} : vector<8x32xbf16>, vector<32x64xbf16>, vector<8x64xf32> -> vector<8x64xf32>
    %c0_37 = arith.constant 0 : index
    %c0_38 = arith.constant 0 : index
    %95 = vector.load %arg7[%c0_37, %c0_38] : memref<1x64xf32, #tpu.memory_space<vmem>>, vector<1x64xf32>
    %96 = vector.shape_cast %95 : vector<1x64xf32> to vector<64xf32>
    %97 = vector.shape_cast %96 : vector<64xf32> to vector<1x64xf32>
    %98 = vector.broadcast %97 : vector<1x64xf32> to vector<8x64xf32>
    %99 = arith.addf %94, %98 : vector<8x64xf32>
    %cst_39 = arith.constant 0.000000e+00 : f32
    %100 = vector.broadcast %cst_39 : f32 to vector<8x64xf32>
    %101 = arith.maximumf %99, %100 : vector<8x64xf32>
    %102 = arith.truncf %101 : vector<8x64xf32> to vector<8x64xbf16>
    %c0_40 = arith.constant 0 : index
    %c0_41 = arith.constant 0 : index
    %103 = vector.load %arg8[%c0_40, %c0_41] : memref<64x32xbf16, #tpu.memory_space<vmem>>, vector<64x32xbf16>
    %cst_42 = arith.constant dense<0.000000e+00> : vector<8x32xf32>
    %104 = tpu.matmul %102, %103, %cst_42 {dimension_numbers = #tpu.dot_dimension_numbers<[1], [0], [0], [1], [0, 0, 1, 1], [], []>} : vector<8x64xbf16>, vector<64x32xbf16>, vector<8x32xf32> -> vector<8x32xf32>
    %c0_43 = arith.constant 0 : index
    %c0_44 = arith.constant 0 : index
    %105 = vector.load %arg9[%c0_43, %c0_44] : memref<1x32xf32, #tpu.memory_space<vmem>>, vector<1x32xf32>
    %106 = vector.shape_cast %105 : vector<1x32xf32> to vector<32xf32>
    %107 = vector.shape_cast %106 : vector<32xf32> to vector<1x32xf32>
    %108 = vector.broadcast %107 : vector<1x32xf32> to vector<8x32xf32>
    %109 = arith.addf %104, %108 : vector<8x32xf32>
    %110 = arith.addf %91, %109 : vector<8x32xf32>
    %cst_45 = arith.constant dense<0.000000e+00> : vector<8xf32>
    %111 = vector.multi_reduction <add>, %110, %cst_45 [1] : vector<8x32xf32> to vector<8xf32>
    %112 = vector.shape_cast %111 : vector<8xf32> to vector<8x1xf32>
    %cst_46 = arith.constant 3.200000e+01 : f32
    %113 = vector.broadcast %cst_46 : f32 to vector<8x1xf32>
    %114 = arith.divf %112, %113 : vector<8x1xf32>
    %115 = vector.broadcast %114 : vector<8x1xf32> to vector<8x32xf32>
    %116 = arith.subf %110, %115 : vector<8x32xf32>
    %117 = arith.mulf %116, %116 : vector<8x32xf32>
    %cst_47 = arith.constant dense<0.000000e+00> : vector<8xf32>
    %118 = vector.multi_reduction <add>, %117, %cst_47 [1] : vector<8x32xf32> to vector<8xf32>
    %119 = vector.shape_cast %118 : vector<8xf32> to vector<8x1xf32>
    %cst_48 = arith.constant 3.200000e+01 : f32
    %120 = vector.broadcast %cst_48 : f32 to vector<8x1xf32>
    %121 = arith.divf %119, %120 : vector<8x1xf32>
    %122 = vector.broadcast %114 : vector<8x1xf32> to vector<8x32xf32>
    %123 = arith.subf %110, %122 : vector<8x32xf32>
    %cst_49 = arith.constant 9.99999974E-6 : f32
    %124 = vector.broadcast %cst_49 : f32 to vector<8x1xf32>
    %125 = arith.addf %121, %124 : vector<8x1xf32>
    %126 = math.rsqrt %125 : vector<8x1xf32>
    %127 = vector.broadcast %126 : vector<8x1xf32> to vector<8x32xf32>
    %128 = arith.mulf %123, %127 : vector<8x32xf32>
    %c0_50 = arith.constant 0 : index
    %c0_51 = arith.constant 0 : index
    %129 = vector.load %arg12[%c0_50, %c0_51] : memref<1x32xf32, #tpu.memory_space<vmem>>, vector<1x32xf32>
    %130 = vector.shape_cast %129 : vector<1x32xf32> to vector<32xf32>
    %131 = vector.shape_cast %130 : vector<32xf32> to vector<1x32xf32>
    %132 = vector.broadcast %131 : vector<1x32xf32> to vector<8x32xf32>
    %133 = arith.mulf %128, %132 : vector<8x32xf32>
    %c0_52 = arith.constant 0 : index
    %c0_53 = arith.constant 0 : index
    %134 = vector.load %arg13[%c0_52, %c0_53] : memref<1x32xf32, #tpu.memory_space<vmem>>, vector<1x32xf32>
    %135 = vector.shape_cast %134 : vector<1x32xf32> to vector<32xf32>
    %136 = vector.shape_cast %135 : vector<32xf32> to vector<1x32xf32>
    %137 = vector.broadcast %136 : vector<1x32xf32> to vector<8x32xf32>
    %138 = arith.addf %133, %137 : vector<8x32xf32>
    %139 = vector.shape_cast %138 : vector<8x32xf32> to vector<1x8x32xf32>
    %c0_54 = arith.constant 0 : index
    %c0_55 = arith.constant 0 : index
    %c0_56 = arith.constant 0 : index
    %140 = vector.load %arg14[%c0_54, %c0_55, %c0_56] : memref<1x8x32xf32, #tpu.memory_space<vmem>>, vector<1x8x32xf32>
    tpu.vector_store %arg14[%c0_54, %c0_55, %c0_56], %139 {strides = array<i32>} : memref<1x8x32xf32, #tpu.memory_space<vmem>>, vector<1x8x32xf32>,
    return
  }
  func.func @transform_0(%arg0: i32) -> (i32, i32, i32) {
    %c0_i32 = arith.constant 0 : i32
    %c0_i32_0 = arith.constant 0 : i32
    %c0_i32_1 = arith.constant 0 : i32
    return %arg0, %c0_i32, %c0_i32_0 : i32, i32, i32
  }
  func.func @transform_1(%arg0: i32) -> (i32, i32) {
    %c0_i32 = arith.constant 0 : i32
    %c0_i32_0 = arith.constant 0 : i32
    %c0_i32_1 = arith.constant 0 : i32
    return %c0_i32, %c0_i32_0 : i32, i32
  }
  func.func @transform_2(%arg0: i32) -> (i32, i32) {
    %c0_i32 = arith.constant 0 : i32
    %c0_i32_0 = arith.constant 0 : i32
    %c0_i32_1 = arith.constant 0 : i32
    return %c0_i32, %c0_i32_0 : i32, i32
  }
  func.func @transform_3(%arg0: i32) -> (i32, i32) {
    %c0_i32 = arith.constant 0 : i32
    %c0_i32_0 = arith.constant 0 : i32
    %c0_i32_1 = arith.constant 0 : i32
    return %c0_i32, %c0_i32_0 : i32, i32
  }
  func.func @transform_4(%arg0: i32) -> (i32, i32) {
    %c0_i32 = arith.constant 0 : i32
    %c0_i32_0 = arith.constant 0 : i32
    %c0_i32_1 = arith.constant 0 : i32
    return %c0_i32, %c0_i32_0 : i32, i32
  }
  func.func @transform_5(%arg0: i32) -> (i32, i32) {
    %c0_i32 = arith.constant 0 : i32
    %c0_i32_0 = arith.constant 0 : i32
    %c0_i32_1 = arith.constant 0 : i32
    return %c0_i32, %c0_i32_0 : i32, i32
  }
  func.func @transform_6(%arg0: i32) -> (i32, i32) {
    %c0_i32 = arith.constant 0 : i32
    %c0_i32_0 = arith.constant 0 : i32
    %c0_i32_1 = arith.constant 0 : i32
    return %c0_i32, %c0_i32_0 : i32, i32
  }
  func.func @transform_7(%arg0: i32) -> (i32, i32) {
    %c0_i32 = arith.constant 0 : i32
    %c0_i32_0 = arith.constant 0 : i32
    %c0_i32_1 = arith.constant 0 : i32
    return %c0_i32, %c0_i32_0 : i32, i32
  }
  func.func @transform_8(%arg0: i32) -> (i32, i32) {
    %c0_i32 = arith.constant 0 : i32
    %c0_i32_0 = arith.constant 0 : i32
    %c0_i32_1 = arith.constant 0 : i32
    return %c0_i32, %c0_i32_0 : i32, i32
  }
  func.func @transform_9(%arg0: i32) -> (i32, i32) {
    %c0_i32 = arith.constant 0 : i32
    %c0_i32_0 = arith.constant 0 : i32
    %c0_i32_1 = arith.constant 0 : i32
    return %c0_i32, %c0_i32_0 : i32, i32
  }
  func.func @transform_10(%arg0: i32) -> (i32, i32) {
    %c0_i32 = arith.constant 0 : i32
    %c0_i32_0 = arith.constant 0 : i32
    %c0_i32_1 = arith.constant 0 : i32
    return %c0_i32, %c0_i32_0 : i32, i32
  }
  func.func @transform_11(%arg0: i32) -> (i32, i32) {
    %c0_i32 = arith.constant 0 : i32
    %c0_i32_0 = arith.constant 0 : i32
    %c0_i32_1 = arith.constant 0 : i32
    return %c0_i32, %c0_i32_0 : i32, i32
  }
  func.func @transform_12(%arg0: i32) -> (i32, i32) {
    %c0_i32 = arith.constant 0 : i32
    %c0_i32_0 = arith.constant 0 : i32
    %c0_i32_1 = arith.constant 0 : i32
    return %c0_i32, %c0_i32_0 : i32, i32
  }
  func.func @transform_13(%arg0: i32) -> (i32, i32, i32) {
    %c0_i32 = arith.constant 0 : i32
    %c0_i32_0 = arith.constant 0 : i32
    %c0_i32_1 = arith.constant 0 : i32
    return %arg0, %c0_i32, %c0_i32_0 : i32, i32, i32
  }
}

</mosaic_0001>

<llo_original>
// kernel: tpu_custom_call.1
$region0: #{tpu_custom_call.1}
  #allocation0 [shape = 'u32[]', space=smem, size = 0x4, offset = 0x4, fixed_abs, tag = 'smem constant byte address 0x4 - core index']
  #allocation1 [shape = 'u32[144,128]{1,0:T(1,128)}', space=vmem, size = 0x12000, scoped, tag = 'internal scratch']
  %s0 = inlined_call_operand.hbm [shape: f32[2,8,32], index: 0, kind: input, shape index: {}]
  %s1 = inlined_call_operand.hbm [shape: bf16[32,64], index: 1, kind: input, shape index: {}]
  %s2 = inlined_call_operand.hbm [shape: bf16[32,64], index: 2, kind: input, shape index: {}]
  %s3 = inlined_call_operand.hbm [shape: bf16[32,64], index: 3, kind: input, shape index: {}]
  %s4 = inlined_call_operand.hbm [shape: bf16[64,32], index: 4, kind: input, shape index: {}]
  %s5 = inlined_call_operand.hbm [shape: bf16[32,64], index: 5, kind: input, shape index: {}]
  %s6 = inlined_call_operand.hbm [shape: f32[1,64], index: 6, kind: input, shape index: {}]
  %s7 = inlined_call_operand.hbm [shape: bf16[64,32], index: 7, kind: input, shape index: {}]
  %s8 = inlined_call_operand.hbm [shape: f32[1,32], index: 8, kind: input, shape index: {}]
  %s9 = inlined_call_operand.hbm [shape: f32[1,32], index: 9, kind: input, shape index: {}]
  %s10 = inlined_call_operand.hbm [shape: f32[1,32], index: 10, kind: input, shape index: {}]
  %s11 = inlined_call_operand.hbm [shape: f32[1,32], index: 11, kind: input, shape index: {}]
  %s12 = inlined_call_operand.hbm [shape: f32[1,32], index: 12, kind: input, shape index: {}]
  %s13 = inlined_call_operand.hbm [shape: f32[2,8,32], index: 13, kind: output, shape index: {}]
  %s14 = sld [smem:[#allocation0]]
  $region137: #{tpu_custom_call.1} parent=0
    _
  %s16 = ssub.s32 1, %s14
  %s17 = scalar_select 0, %s16, %s14
  $region1: #{tpu_custom_call.1} parent=0
    #allocation2 [shape = 'u8[8192]{0}', space=vmem, size = 0x2000, scoped, tag = 'input window, operand 0']
    #allocation3 [shape = 's32[2]{0}', space=sflag, size = 0x8, scoped, tag = 'scoped memory for tpu_custom_call.1']
    #allocation4 [shape = 's32[2]{0}', space=sflag, size = 0x8, scoped, tag = 'scoped memory for tpu_custom_call.1']
    #allocation5 [shape = 'u8[8192]{0}', space=vmem, size = 0x2000, scoped, tag = 'input window, operand 1, single buffered']
    #allocation6 [shape = 's32[1]{0}', space=sflag, size = 0x4, scoped, tag = 'scoped memory for tpu_custom_call.1']
    #allocation7 [shape = 'u8[8192]{0}', space=vmem, size = 0x2000, scoped, tag = 'input window, operand 2, single buffered']
    #allocation8 [shape = 'u8[8192]{0}', space=vmem, size = 0x2000, scoped, tag = 'input window, operand 3, single buffered']
    #allocation9 [shape = 's32[1]{0}', space=sflag, size = 0x4, scoped, tag = 'scoped memory for tpu_custom_call.1']
    #allocation10 [shape = 'u8[16384]{0}', space=vmem, size = 0x4000, scoped, tag = 'input window, operand 4, single buffered']
    #allocation11 [shape = 'u8[8192]{0}', space=vmem, size = 0x2000, scoped, tag = 'input window, operand 5, single buffered']
    #allocation12 [shape = 's32[1]{0}', space=sflag, size = 0x4, scoped, tag = 'scoped memory for tpu_custom_call.1']
    #allocation13 [shape = 'u8[512]{0}', space=vmem, size = 0x400, scoped, tag = 'input window, operand 6, single buffered']
    #allocation14 [shape = 'u8[16384]{0}', space=vmem, size = 0x4000, scoped, tag = 'input window, operand 7, single buffered']
    #allocation15 [shape = 's32[1]{0}', space=sflag, size = 0x4, scoped, tag = 'scoped memory for tpu_custom_call.1']
    #allocation16 [shape = 'u8[512]{0}', space=vmem, size = 0x400, scoped, tag = 'input window, operand 8, single buffered']
    #allocation17 [shape = 'u8[512]{0}', space=vmem, size = 0x400, scoped, tag = 'input window, operand 9, single buffered']
    #allocation18 [shape = 's32[1]{0}', space=sflag, size = 0x4, scoped, tag = 'scoped memory for tpu_custom_call.1']
    #allocation19 [shape = 'u8[512]{0}', space=vmem, size = 0x400, scoped, tag = 'input window, operand 10, single buffered']
    #allocation20 [shape = 'u8[512]{0}', space=vmem, size = 0x400, scoped, tag = 'input window, operand 11, single buffered']
    #allocation21 [shape = 's32[1]{0}', space=sflag, size = 0x4, scoped, tag = 'scoped memory for tpu_custom_call.1']
    #allocation22 [shape = 'u8[512]{0}', space=vmem, size = 0x400, scoped, tag = 'input window, operand 12, single buffered']
    #allocation23 [shape = 'u8[8192]{0}', space=vmem, size = 0x2000, scoped, tag = 'output window, operand 0']
    %18 = vsyncpa [#allocation3], 0
    %s19 = scalar_lea.sflag [#allocation3], 1
    %20 = vsyncpa %s19, 0
    %21 = vsyncpa [#allocation6], 0
    %22 = vsyncpa [#allocation9], 0
    %23 = vsyncpa [#allocation12], 0
    %24 = vsyncpa [#allocation15], 0
    %25 = vsyncpa [#allocation18], 0
    %26 = vsyncpa [#allocation21], 0
    %27 = vsyncpa [#allocation4], 0
    %s28 = scalar_lea.sflag [#allocation4], 1
    %29 = vsyncpa %s28, 0
    loop: start=0, step=1, limit=4
    $region2: #{tpu_custom_call.1} parent=1 // loop_pre_header
      _
    $region3: #{tpu_custom_call.1} parent=1 // loop_header
      %s31 = sphi 0, %s35
      %p32 = scmp.ge.s32.totalorder %s31, 4
      %s41 = sphi 0, %s43
      %s44 = sphi 0, %s41
      %s45 = sphi 0, %s44
      %s61 = sphi 0, %s45
      %s65 = sphi 0, %s65
      %s67 = sphi 0, %s65
      %s68 = sphi 0, %s67
      %s82 = sphi 0, %s68
      %s86 = sphi 0, %s86
      %s88 = sphi 0, %s86
      %s89 = sphi 0, %s88
      %s103 = sphi 0, %s89
      %s107 = sphi 0, %s107
      %s109 = sphi 0, %s107
      %s110 = sphi 0, %s109
      %s124 = sphi 0, %s110
      %s128 = sphi 0, %s128
      %s130 = sphi 0, %s128
      %s131 = sphi 0, %s130
      %s145 = sphi 0, %s131
      %s149 = sphi 0, %s149
      %s151 = sphi 0, %s149
      %s152 = sphi 0, %s151
      %s166 = sphi 0, %s152
      %s170 = sphi 0, %s170
      %s172 = sphi 0, %s170
      %s173 = sphi 0, %s172
      %s187 = sphi 0, %s173
      %s191 = sphi 0, %s191
      %s193 = sphi 0, %s191
      %s194 = sphi 0, %s193
      %s208 = sphi 0, %s194
      %s212 = sphi 0, %s212
      %s214 = sphi 0, %s212
      %s215 = sphi 0, %s214
      %s229 = sphi 0, %s215
      %s233 = sphi 0, %s233
      %s235 = sphi 0, %s233
      %s236 = sphi 0, %s235
      %s250 = sphi 0, %s236
      %s254 = sphi 0, %s254
      %s256 = sphi 0, %s254
      %s257 = sphi 0, %s256
      %s271 = sphi 0, %s257
      %s275 = sphi 0, %s275
      %s277 = sphi 0, %s275
      %s278 = sphi 0, %s277
      %s292 = sphi 0, %s278
      %s296 = sphi 0, %s296
      %s298 = sphi 0, %s296
      %s299 = sphi 0, %s298
      %s313 = sphi 0, %s299
      %s319 = sphi 0, %s321
      %s322 = sphi 0, %s319
      %s323 = sphi 0, %s322
      %s339 = sphi 0, %s323
    $region4: #{tpu_custom_call.1} parent=1 // loop_header_branch
      %34 = sbr.rel (%p32) target = $region8
    $region5: #{tpu_custom_call.1} parent=1 // loop_body
      %s36 = ssub.s32 %s31, 1
      %s37 = ssub.s32 %s31, 2
      %s38 = sadd.s32 %s31, 1
      %s39 = ssub.s32 %s31, %s38
      %p40 = scmp.eq.s32.totalorder %s39, 0
      %s42 = sadd.s32 %s41, 1
      %s43 = scalar_select %p40, %s41, %s42
      %p46 = pneg %p40
      %p47 = scmp.eq.s32.totalorder %s31, 1
      %p48 = por %p46, %p47
      %p49 = scmp.ne.s32.totalorder %s41, %s44
      %p50 = scmp.eq.s32.totalorder %s31, 0
      %p51 = por %p49, %p50
      %p52 = scmp.ne.s32.totalorder %s41, %s44
      %p53 = scmp.eq.s32.totalorder %s36, 1
      %p54 = por %p52, %p53
      %p55 = scmp.ne.s32.totalorder %s44, %s45
      %p56 = scmp.eq.s32.totalorder %s36, 0
      %p57 = por %p55, %p56
      %p58 = scmp.ne.s32.totalorder %s44, %s45
      %p59 = scmp.eq.s32.totalorder %s37, 1
      %p60 = por %p58, %p59
      %p62 = scmp.ne.s32.totalorder %s45, %s61
      %p63 = scmp.eq.s32.totalorder %s37, 0
      %p64 = por %p62, %p63
      %s66 = sadd.s32 %s65, 1
      %p69 = scmp.eq.s32.totalorder %s31, 1
      %p70 = scmp.ne.s32.totalorder %s65, %s67
      %p71 = scmp.eq.s32.totalorder %s31, 0
      %p72 = por %p70, %p71
      %p73 = scmp.ne.s32.totalorder %s65, %s67
      %p74 = scmp.eq.s32.totalorder %s36, 1
      %p75 = por %p73, %p74
      %p76 = scmp.ne.s32.totalorder %s67, %s68
      %p77 = scmp.eq.s32.totalorder %s36, 0
      %p78 = por %p76, %p77
      %p79 = scmp.ne.s32.totalorder %s67, %s68
      %p80 = scmp.eq.s32.totalorder %s37, 1
      %p81 = por %p79, %p80
      %p83 = scmp.ne.s32.totalorder %s68, %s82
      %p84 = scmp.eq.s32.totalorder %s37, 0
      %p85 = por %p83, %p84
      %s87 = sadd.s32 %s86, 1
      %p90 = scmp.eq.s32.totalorder %s31, 1
      %p91 = scmp.ne.s32.totalorder %s86, %s88
      %p92 = scmp.eq.s32.totalorder %s31, 0
      %p93 = por %p91, %p92
      %p94 = scmp.ne.s32.totalorder %s86, %s88
      %p95 = scmp.eq.s32.totalorder %s36, 1
      %p96 = por %p94, %p95
      %p97 = scmp.ne.s32.totalorder %s88, %s89
      %p98 = scmp.eq.s32.totalorder %s36, 0
      %p99 = por %p97, %p98
      %p100 = scmp.ne.s32.totalorder %s88, %s89
      %p101 = scmp.eq.s32.totalorder %s37, 1
      %p102 = por %p100, %p101
      %p104 = scmp.ne.s32.totalorder %s89, %s103
      %p105 = scmp.eq.s32.totalorder %s37, 0
      %p106 = por %p104, %p105
      %s108 = sadd.s32 %s107, 1
      %p111 = scmp.eq.s32.totalorder %s31, 1
      %p112 = scmp.ne.s32.totalorder %s107, %s109
      %p113 = scmp.eq.s32.totalorder %s31, 0
      %p114 = por %p112, %p113
      %p115 = scmp.ne.s32.totalorder %s107, %s109
      %p116 = scmp.eq.s32.totalorder %s36, 1
      %p117 = por %p115, %p116
      %p118 = scmp.ne.s32.totalorder %s109, %s110
      %p119 = scmp.eq.s32.totalorder %s36, 0
      %p120 = por %p118, %p119
      %p121 = scmp.ne.s32.totalorder %s109, %s110
      %p122 = scmp.eq.s32.totalorder %s37, 1
      %p123 = por %p121, %p122
      %p125 = scmp.ne.s32.totalorder %s110, %s124
      %p126 = scmp.eq.s32.totalorder %s37, 0
      %p127 = por %p125, %p126
      %s129 = sadd.s32 %s128, 1
      %p132 = scmp.eq.s32.totalorder %s31, 1
      %p133 = scmp.ne.s32.totalorder %s128, %s130
      %p134 = scmp.eq.s32.totalorder %s31, 0
      %p135 = por %p133, %p134
      %p136 = scmp.ne.s32.totalorder %s128, %s130
      %p137 = scmp.eq.s32.totalorder %s36, 1
      %p138 = por %p136, %p137
      %p139 = scmp.ne.s32.totalorder %s130, %s131
      %p140 = scmp.eq.s32.totalorder %s36, 0
      %p141 = por %p139, %p140
      %p142 = scmp.ne.s32.totalorder %s130, %s131
      %p143 = scmp.eq.s32.totalorder %s37, 1
      %p144 = por %p142, %p143
      %p146 = scmp.ne.s32.totalorder %s131, %s145
      %p147 = scmp.eq.s32.totalorder %s37, 0
      %p148 = por %p146, %p147
      %s150 = sadd.s32 %s149, 1
      %p153 = scmp.eq.s32.totalorder %s31, 1
      %p154 = scmp.ne.s32.totalorder %s149, %s151
      %p155 = scmp.eq.s32.totalorder %s31, 0
      %p156 = por %p154, %p155
      %p157 = scmp.ne.s32.totalorder %s149, %s151
      %p158 = scmp.eq.s32.totalorder %s36, 1
      %p159 = por %p157, %p158
      %p160 = scmp.ne.s32.totalorder %s151, %s152
      %p161 = scmp.eq.s32.totalorder %s36, 0
      %p162 = por %p160, %p161
      %p163 = scmp.ne.s32.totalorder %s151, %s152
      %p164 = scmp.eq.s32.totalorder %s37, 1
      %p165 = por %p163, %p164
      %p167 = scmp.ne.s32.totalorder %s152, %s166
      %p168 = scmp.eq.s32.totalorder %s37, 0
      %p169 = por %p167, %p168
      %s171 = sadd.s32 %s170, 1
      %p174 = scmp.eq.s32.totalorder %s31, 1
      %p175 = scmp.ne.s32.totalorder %s170, %s172
      %p176 = scmp.eq.s32.totalorder %s31, 0
      %p177 = por %p175, %p176
      %p178 = scmp.ne.s32.totalorder %s170, %s172
      %p179 = scmp.eq.s32.totalorder %s36, 1
      %p180 = por %p178, %p179
      %p181 = scmp.ne.s32.totalorder %s172, %s173
      %p182 = scmp.eq.s32.totalorder %s36, 0
      %p183 = por %p181, %p182
      %p184 = scmp.ne.s32.totalorder %s172, %s173
      %p185 = scmp.eq.s32.totalorder %s37, 1
      %p186 = por %p184, %p185
      %p188 = scmp.ne.s32.totalorder %s173, %s187
      %p189 = scmp.eq.s32.totalorder %s37, 0
      %p190 = por %p188, %p189
      %s192 = sadd.s32 %s191, 1
      %p195 = scmp.eq.s32.totalorder %s31, 1
      %p196 = scmp.ne.s32.totalorder %s191, %s193
      %p197 = scmp.eq.s32.totalorder %s31, 0
      %p198 = por %p196, %p197
      %p199 = scmp.ne.s32.totalorder %s191, %s193
      %p200 = scmp.eq.s32.totalorder %s36, 1
      %p201 = por %p199, %p200
      %p202 = scmp.ne.s32.totalorder %s193, %s194
      %p203 = scmp.eq.s32.totalorder %s36, 0
      %p204 = por %p202, %p203
      %p205 = scmp.ne.s32.totalorder %s193, %s194
      %p206 = scmp.eq.s32.totalorder %s37, 1
      %p207 = por %p205, %p206
      %p209 = scmp.ne.s32.totalorder %s194, %s208
      %p210 = scmp.eq.s32.totalorder %s37, 0
      %p211 = por %p209, %p210
      %s213 = sadd.s32 %s212, 1
      %p216 = scmp.eq.s32.totalorder %s31, 1
      %p217 = scmp.ne.s32.totalorder %s212, %s214
      %p218 = scmp.eq.s32.totalorder %s31, 0
      %p219 = por %p217, %p218
      %p220 = scmp.ne.s32.totalorder %s212, %s214
      %p221 = scmp.eq.s32.totalorder %s36, 1
      %p222 = por %p220, %p221
      %p223 = scmp.ne.s32.totalorder %s214, %s215
      %p224 = scmp.eq.s32.totalorder %s36, 0
      %p225 = por %p223, %p224
      %p226 = scmp.ne.s32.totalorder %s214, %s215
      %p227 = scmp.eq.s32.totalorder %s37, 1
      %p228 = por %p226, %p227
      %p230 = scmp.ne.s32.totalorder %s215, %s229
      %p231 = scmp.eq.s32.totalorder %s37, 0
      %p232 = por %p230, %p231
      %s234 = sadd.s32 %s233, 1
      %p237 = scmp.eq.s32.totalorder %s31, 1
      %p238 = scmp.ne.s32.totalorder %s233, %s235
      %p239 = scmp.eq.s32.totalorder %s31, 0
      %p240 = por %p238, %p239
      %p241 = scmp.ne.s32.totalorder %s233, %s235
      %p242 = scmp.eq.s32.totalorder %s36, 1
      %p243 = por %p241, %p242
      %p244 = scmp.ne.s32.totalorder %s235, %s236
      %p245 = scmp.eq.s32.totalorder %s36, 0
      %p246 = por %p244, %p245
      %p247 = scmp.ne.s32.totalorder %s235, %s236
      %p248 = scmp.eq.s32.totalorder %s37, 1
      %p249 = por %p247, %p248
      %p251 = scmp.ne.s32.totalorder %s236, %s250
      %p252 = scmp.eq.s32.totalorder %s37, 0
      %p253 = por %p251, %p252
      %s255 = sadd.s32 %s254, 1
      %p258 = scmp.eq.s32.totalorder %s31, 1
      %p259 = scmp.ne.s32.totalorder %s254, %s256
      %p260 = scmp.eq.s32.totalorder %s31, 0
      %p261 = por %p259, %p260
      %p262 = scmp.ne.s32.totalorder %s254, %s256
      %p263 = scmp.eq.s32.totalorder %s36, 1
      %p264 = por %p262, %p263
      %p265 = scmp.ne.s32.totalorder %s256, %s257
      %p266 = scmp.eq.s32.totalorder %s36, 0
      %p267 = por %p265, %p266
      %p268 = scmp.ne.s32.totalorder %s256, %s257
      %p269 = scmp.eq.s32.totalorder %s37, 1
      %p270 = por %p268, %p269
      %p272 = scmp.ne.s32.totalorder %s257, %s271
      %p273 = scmp.eq.s32.totalorder %s37, 0
      %p274 = por %p272, %p273
      %s276 = sadd.s32 %s275, 1
      %p279 = scmp.eq.s32.totalorder %s31, 1
      %p280 = scmp.ne.s32.totalorder %s275, %s277
      %p281 = scmp.eq.s32.totalorder %s31, 0
      %p282 = por %p280, %p281
      %p283 = scmp.ne.s32.totalorder %s275, %s277
      %p284 = scmp.eq.s32.totalorder %s36, 1
      %p285 = por %p283, %p284
      %p286 = scmp.ne.s32.totalorder %s277, %s278
      %p287 = scmp.eq.s32.totalorder %s36, 0
      %p288 = por %p286, %p287
      %p289 = scmp.ne.s32.totalorder %s277, %s278
      %p290 = scmp.eq.s32.totalorder %s37, 1
      %p291 = por %p289, %p290
      %p293 = scmp.ne.s32.totalorder %s278, %s292
      %p294 = scmp.eq.s32.totalorder %s37, 0
      %p295 = por %p293, %p294
      %s297 = sadd.s32 %s296, 1
      %p300 = scmp.eq.s32.totalorder %s31, 1
      %p301 = scmp.ne.s32.totalorder %s296, %s298
      %p302 = scmp.eq.s32.totalorder %s31, 0
      %p303 = por %p301, %p302
      %p304 = scmp.ne.s32.totalorder %s296, %s298
      %p305 = scmp.eq.s32.totalorder %s36, 1
      %p306 = por %p304, %p305
      %p307 = scmp.ne.s32.totalorder %s298, %s299
      %p308 = scmp.eq.s32.totalorder %s36, 0
      %p309 = por %p307, %p308
      %p310 = scmp.ne.s32.totalorder %s298, %s299
      %p311 = scmp.eq.s32.totalorder %s37, 1
      %p312 = por %p310, %p311
      %p314 = scmp.ne.s32.totalorder %s299, %s313
      %p315 = scmp.eq.s32.totalorder %s37, 0
      %p316 = por %p314, %p315
      %s317 = ssub.s32 %s31, %s38
      %p318 = scmp.eq.s32.totalorder %s317, 0
      %s320 = sadd.s32 %s319, 1
      %s321 = scalar_select %p318, %s319, %s320
      %p324 = pneg %p318
      %p325 = scmp.eq.s32.totalorder %s31, 1
      %p326 = por %p324, %p325
      %p327 = scmp.ne.s32.totalorder %s319, %s322
      %p328 = scmp.eq.s32.totalorder %s31, 0
      %p329 = por %p327, %p328
      %p330 = scmp.ne.s32.totalorder %s319, %s322
      %p331 = scmp.eq.s32.totalorder %s36, 1
      %p332 = por %p330, %p331
      %p333 = scmp.ne.s32.totalorder %s322, %s323
      %p334 = scmp.eq.s32.totalorder %s36, 0
      %p335 = por %p333, %p334
      %p336 = scmp.ne.s32.totalorder %s322, %s323
      %p337 = scmp.eq.s32.totalorder %s37, 1
      %p338 = por %p336, %p337
      %p340 = scmp.ne.s32.totalorder %s323, %s339
      %p341 = scmp.eq.s32.totalorder %s37, 0
      %p342 = por %p340, %p341
      %p343 = scmp.le.s32.totalorder 1, %s31
      %p344 = scmp.lt.s32.totalorder %s31, 3
      %p345 = pnand %p343, %p344
      %p346 = pneg %p345
      // Predicated region
      $region9: #{tpu_custom_call.1} parent=5 // pred_check
        _
      $region10: #{tpu_custom_call.1} parent=5 // pred_check_branch
        %348 = sbr.rel (%p345) target = $region12
      $region11: #{tpu_custom_call.1} parent=5 // pred_region
        %s349 = ssub.s32 %s31, 1
        // Predicated region
        $region13: #{tpu_custom_call.1} parent=11 // pred_check
          %p350 = pneg %p78
        $region14: #{tpu_custom_call.1} parent=11 // pred_check_branch
          %352 = sbr.rel (%p350) target = $region16
        $region15: #{tpu_custom_call.1} parent=11 // pred_region
          %s354 = ssub.s32 256, 256
          %355 = vsyncadd [#allocation6], %s354
          %s356 = sshll.u32 [#allocation5], 4
          %s357 = int_to_ptr.vmem [resolvable:$true] %s356
          %362 = dma.hbm_to_vmem [thread:$0]  %s1, 256, %s357, [#allocation6], 64, 64, 4
        $region16: #{tpu_custom_call.1} parent=11 // pred_fallthru
          _
        // Predicated region
        $region17: #{tpu_custom_call.1} parent=11 // pred_check
          %p363 = pneg %p99
        $region18: #{tpu_custom_call.1} parent=11 // pred_check_branch
          %365 = sbr.rel (%p363) target = $region20
        $region19: #{tpu_custom_call.1} parent=11 // pred_region
          %s367 = ssub.s32 256, 256
          %368 = vsyncadd [#allocation6], %s367
          %s369 = sshll.u32 [#allocation7], 4
          %s370 = int_to_ptr.vmem [resolvable:$true] %s369
          %375 = dma.hbm_to_vmem [thread:$0]  %s2, 256, %s370, [#allocation6], 64, 64, 4
        $region20: #{tpu_custom_call.1} parent=11 // pred_fallthru
          _
        // Predicated region
        $region21: #{tpu_custom_call.1} parent=11 // pred_check
          %p376 = pneg %p120
        $region22: #{tpu_custom_call.1} parent=11 // pred_check_branch
          %378 = sbr.rel (%p376) target = $region24
        $region23: #{tpu_custom_call.1} parent=11 // pred_region
          %s380 = ssub.s32 256, 256
          %381 = vsyncadd [#allocation9], %s380
          %s382 = sshll.u32 [#allocation8], 4
          %s383 = int_to_ptr.vmem [resolvable:$true] %s382
          %388 = dma.hbm_to_vmem [thread:$0]  %s3, 256, %s383, [#allocation9], 64, 64, 4
        $region24: #{tpu_custom_call.1} parent=11 // pred_fallthru
          _
        // Predicated region
        $region25: #{tpu_custom_call.1} parent=11 // pred_check
          %p389 = pneg %p141
        $region26: #{tpu_custom_call.1} parent=11 // pred_check_branch
          %391 = sbr.rel (%p389) target = $region28
        $region27: #{tpu_custom_call.1} parent=11 // pred_region
          %s393 = ssub.s32 512, 512
          %394 = vsyncadd [#allocation9], %s393
          %s395 = sshll.u32 [#allocation10], 4
          %s396 = int_to_ptr.vmem [resolvable:$true] %s395
          %401 = dma.hbm_to_vmem [thread:$0]  %s4, 512, %s396, [#allocation9], 64, 64, 4
        $region28: #{tpu_custom_call.1} parent=11 // pred_fallthru
          _
        // Predicated region
        $region29: #{tpu_custom_call.1} parent=11 // pred_check
          %p402 = pneg %p162
        $region30: #{tpu_custom_call.1} parent=11 // pred_check_branch
          %404 = sbr.rel (%p402) target = $region32
        $region31: #{tpu_custom_call.1} parent=11 // pred_region
          %s406 = ssub.s32 256, 256
          %407 = vsyncadd [#allocation12], %s406
          %s408 = sshll.u32 [#allocation11], 4
          %s409 = int_to_ptr.vmem [resolvable:$true] %s408
          %414 = dma.hbm_to_vmem [thread:$0]  %s5, 256, %s409, [#allocation12], 64, 64, 4
        $region32: #{tpu_custom_call.1} parent=11 // pred_fallthru
          _
        // Predicated region
        $region33: #{tpu_custom_call.1} parent=11 // pred_check
          %p415 = pneg %p183
        $region34: #{tpu_custom_call.1} parent=11 // pred_check_branch
          %417 = sbr.rel (%p415) target = $region36
        $region35: #{tpu_custom_call.1} parent=11 // pred_region
          %s419 = ssub.s32 16, 16
          %420 = vsyncadd [#allocation12], %s419
          %s422 = sshll.u32 [#allocation13], 4
          %s423 = int_to_ptr.vmem [resolvable:$true] %s422
          %425 = dma.hbm_to_vmem [thread:$0]  %s6, 16, %s423, [#allocation12]
        $region36: #{tpu_custom_call.1} parent=11 // pred_fallthru
          _
        // Predicated region
        $region37: #{tpu_custom_call.1} parent=11 // pred_check
          %p426 = pneg %p204
        $region38: #{tpu_custom_call.1} parent=11 // pred_check_branch
          %428 = sbr.rel (%p426) target = $region40
        $region39: #{tpu_custom_call.1} parent=11 // pred_region
          %s430 = ssub.s32 512, 512
          %431 = vsyncadd [#allocation15], %s430
          %s432 = sshll.u32 [#allocation14], 4
          %s433 = int_to_ptr.vmem [resolvable:$true] %s432
          %438 = dma.hbm_to_vmem [thread:$0]  %s7, 512, %s433, [#allocation15], 64, 64, 4
        $region40: #{tpu_custom_call.1} parent=11 // pred_fallthru
          _
        // Predicated region
        $region41: #{tpu_custom_call.1} parent=11 // pred_check
          %p439 = pneg %p225
        $region42: #{tpu_custom_call.1} parent=11 // pred_check_branch
          %441 = sbr.rel (%p439) target = $region44
        $region43: #{tpu_custom_call.1} parent=11 // pred_region
          %s443 = ssub.s32 16, 16
          %444 = vsyncadd [#allocation15], %s443
          %s446 = sshll.u32 [#allocation16], 4
          %s447 = int_to_ptr.vmem [resolvable:$true] %s446
          %449 = dma.hbm_to_vmem [thread:$0]  %s8, 16, %s447, [#allocation15]
        $region44: #{tpu_custom_call.1} parent=11 // pred_fallthru
          _
        // Predicated region
        $region45: #{tpu_custom_call.1} parent=11 // pred_check
          %p450 = pneg %p246
        $region46: #{tpu_custom_call.1} parent=11 // pred_check_branch
          %452 = sbr.rel (%p450) target = $region48
        $region47: #{tpu_custom_call.1} parent=11 // pred_region
          %s454 = ssub.s32 16, 16
          %455 = vsyncadd [#allocation18], %s454
          %s457 = sshll.u32 [#allocation17], 4
          %s458 = int_to_ptr.vmem [resolvable:$true] %s457
          %460 = dma.hbm_to_vmem [thread:$0]  %s9, 16, %s458, [#allocation18]
        $region48: #{tpu_custom_call.1} parent=11 // pred_fallthru
          _
        // Predicated region
        $region49: #{tpu_custom_call.1} parent=11 // pred_check
          %p461 = pneg %p267
        $region50: #{tpu_custom_call.1} parent=11 // pred_check_branch
          %463 = sbr.rel (%p461) target = $region52
        $region51: #{tpu_custom_call.1} parent=11 // pred_region
          %s465 = ssub.s32 16, 16
          %466 = vsyncadd [#allocation18], %s465
          %s468 = sshll.u32 [#allocation19], 4
          %s469 = int_to_ptr.vmem [resolvable:$true] %s468
          %471 = dma.hbm_to_vmem [thread:$0]  %s10, 16, %s469, [#allocation18]
        $region52: #{tpu_custom_call.1} parent=11 // pred_fallthru
          _
        // Predicated region
        $region53: #{tpu_custom_call.1} parent=11 // pred_check
          %p472 = pneg %p288
        $region54: #{tpu_custom_call.1} parent=11 // pred_check_branch
          %474 = sbr.rel (%p472) target = $region56
        $region55: #{tpu_custom_call.1} parent=11 // pred_region
          %s476 = ssub.s32 16, 16
          %477 = vsyncadd [#allocation21], %s476
          %s479 = sshll.u32 [#allocation20], 4
          %s480 = int_to_ptr.vmem [resolvable:$true] %s479
          %482 = dma.hbm_to_vmem [thread:$0]  %s11, 16, %s480, [#allocation21]
        $region56: #{tpu_custom_call.1} parent=11 // pred_fallthru
          _
        // Predicated region
        $region57: #{tpu_custom_call.1} parent=11 // pred_check
          %p483 = pneg %p309
        $region58: #{tpu_custom_call.1} parent=11 // pred_check_branch
          %485 = sbr.rel (%p483) target = $region60
        $region59: #{tpu_custom_call.1} parent=11 // pred_region
          %s487 = ssub.s32 16, 16
          %488 = vsyncadd [#allocation21], %s487
          %s490 = sshll.u32 [#allocation22], 4
          %s491 = int_to_ptr.vmem [resolvable:$true] %s490
          %493 = dma.hbm_to_vmem [thread:$0]  %s12, 16, %s491, [#allocation21]
        $region60: #{tpu_custom_call.1} parent=11 // pred_fallthru
          _
      $region12: #{tpu_custom_call.1} parent=5 // pred_fallthru
        _
      %p494 = scmp.lt.s32.totalorder %s31, 2
      // Predicated region
      $region61: #{tpu_custom_call.1} parent=5 // pred_check
        %p495 = pneg %p494
      $region62: #{tpu_custom_call.1} parent=5 // pred_check_branch
        %497 = sbr.rel (%p495) target = $region64
      $region63: #{tpu_custom_call.1} parent=5 // pred_region
        // Predicated region
        $region65: #{tpu_custom_call.1} parent=63 // pred_check
          %p498 = pneg %p51
        $region66: #{tpu_custom_call.1} parent=63 // pred_check_branch
          %500 = sbr.rel (%p498) target = $region68
        $region67: #{tpu_custom_call.1} parent=63 // pred_region
          %s501 = sand.u32 %s41, 1
          %s502 = scalar_lea.sflag [#allocation3], %s501
          %s503 = sand.u32 %s41, 1
          %s504 = smul.addr %s503, 8
          %s505 = scalar_lea.vmem [#allocation2], %s504
          %s507 = ssub.s32 128, 128
          %508 = vsyncadd %s502, %s507
          %s509 = smul.addr %s31, 128
          %s510 = scalar_lea.hbm %s0, %s509
          %s512 = sshll.u32 %s505, 4
          %s513 = int_to_ptr.vmem [resolvable:$true] %s512
          %515 = dma.hbm_to_vmem [thread:$0]  %s510, 128, %s513, %s502
        $region68: #{tpu_custom_call.1} parent=63 // pred_fallthru
          _
      $region64: #{tpu_custom_call.1} parent=5 // pred_fallthru
        _
      %p516 = scmp.le.s32.totalorder 1, %s31
      %p517 = scmp.lt.s32.totalorder %s31, 3
      %p518 = pnand %p516, %p517
      %p519 = pneg %p518
      // Predicated region
      $region69: #{tpu_custom_call.1} parent=5 // pred_check
        _
      $region70: #{tpu_custom_call.1} parent=5 // pred_check_branch
        %521 = sbr.rel (%p518) target = $region72
      $region71: #{tpu_custom_call.1} parent=5 // pred_region
        %s522 = ssub.s32 %s31, 1
        %s523 = sand.u32 %s44, 1
        %s524 = scalar_lea.sflag [#allocation3], %s523
        %s525 = sand.u32 %s44, 1
        %s526 = smul.addr %s525, 8
        %s527 = scalar_lea.vmem [#allocation2], %s526
        // Predicated region
        $region73: #{tpu_custom_call.1} parent=71 // pred_check
          %p528 = pneg %p57
        $region74: #{tpu_custom_call.1} parent=71 // pred_check_branch
          %530 = sbr.rel (%p528) target = $region76
        $region75: #{tpu_custom_call.1} parent=71 // pred_region
          %531 = dma.done %s524, 128
        $region76: #{tpu_custom_call.1} parent=71 // pred_fallthru
          _
        // Predicated region
        $region77: #{tpu_custom_call.1} parent=71 // pred_check
          %p532 = pneg %p78
        $region78: #{tpu_custom_call.1} parent=71 // pred_check_branch
          %534 = sbr.rel (%p532) target = $region80
        $region79: #{tpu_custom_call.1} parent=71 // pred_region
          %535 = dma.done [#allocation6], 256
        $region80: #{tpu_custom_call.1} parent=71 // pred_fallthru
          _
        // Predicated region
        $region81: #{tpu_custom_call.1} parent=71 // pred_check
          %p536 = pneg %p99
        $region82: #{tpu_custom_call.1} parent=71 // pred_check_branch
          %538 = sbr.rel (%p536) target = $region84
        $region83: #{tpu_custom_call.1} parent=71 // pred_region
          %539 = dma.done [#allocation6], 256
        $region84: #{tpu_custom_call.1} parent=71 // pred_fallthru
          _
        // Predicated region
        $region85: #{tpu_custom_call.1} parent=71 // pred_check
          %p540 = pneg %p120
        $region86: #{tpu_custom_call.1} parent=71 // pred_check_branch
          %542 = sbr.rel (%p540) target = $region88
        $region87: #{tpu_custom_call.1} parent=71 // pred_region
          %543 = dma.done [#allocation9], 256
        $region88: #{tpu_custom_call.1} parent=71 // pred_fallthru
          _
        // Predicated region
        $region89: #{tpu_custom_call.1} parent=71 // pred_check
          %p544 = pneg %p141
        $region90: #{tpu_custom_call.1} parent=71 // pred_check_branch
          %546 = sbr.rel (%p544) target = $region92
        $region91: #{tpu_custom_call.1} parent=71 // pred_region
          %547 = dma.done [#allocation9], 512
        $region92: #{tpu_custom_call.1} parent=71 // pred_fallthru
          _
        // Predicated region
        $region93: #{tpu_custom_call.1} parent=71 // pred_check
          %p548 = pneg %p162
        $region94: #{tpu_custom_call.1} parent=71 // pred_check_branch
          %550 = sbr.rel (%p548) target = $region96
        $region95: #{tpu_custom_call.1} parent=71 // pred_region
          %551 = dma.done [#allocation12], 256
        $region96: #{tpu_custom_call.1} parent=71 // pred_fallthru
          _
        // Predicated region
        $region97: #{tpu_custom_call.1} parent=71 // pred_check
          %p552 = pneg %p183
        $region98: #{tpu_custom_call.1} parent=71 // pred_check_branch
          %554 = sbr.rel (%p552) target = $region100
        $region99: #{tpu_custom_call.1} parent=71 // pred_region
          %555 = dma.done [#allocation12], 16
        $region100: #{tpu_custom_call.1} parent=71 // pred_fallthru
          _
        // Predicated region
        $region101: #{tpu_custom_call.1} parent=71 // pred_check
          %p556 = pneg %p204
        $region102: #{tpu_custom_call.1} parent=71 // pred_check_branch
          %558 = sbr.rel (%p556) target = $region104
        $region103: #{tpu_custom_call.1} parent=71 // pred_region
          %559 = dma.done [#allocation15], 512
        $region104: #{tpu_custom_call.1} parent=71 // pred_fallthru
          _
        // Predicated region
        $region105: #{tpu_custom_call.1} parent=71 // pred_check
          %p560 = pneg %p225
        $region106: #{tpu_custom_call.1} parent=71 // pred_check_branch
          %562 = sbr.rel (%p560) target = $region108
        $region107: #{tpu_custom_call.1} parent=71 // pred_region
          %563 = dma.done [#allocation15], 16
        $region108: #{tpu_custom_call.1} parent=71 // pred_fallthru
          _
        // Predicated region
        $region109: #{tpu_custom_call.1} parent=71 // pred_check
          %p564 = pneg %p246
        $region110: #{tpu_custom_call.1} parent=71 // pred_check_branch
          %566 = sbr.rel (%p564) target = $region112
        $region111: #{tpu_custom_call.1} parent=71 // pred_region
          %567 = dma.done [#allocation18], 16
        $region112: #{tpu_custom_call.1} parent=71 // pred_fallthru
          _
        // Predicated region
        $region113: #{tpu_custom_call.1} parent=71 // pred_check
          %p568 = pneg %p267
        $region114: #{tpu_custom_call.1} parent=71 // pred_check_branch
          %570 = sbr.rel (%p568) target = $region116
        $region115: #{tpu_custom_call.1} parent=71 // pred_region
          %571 = dma.done [#allocation18], 16
        $region116: #{tpu_custom_call.1} parent=71 // pred_fallthru
          _
        // Predicated region
        $region117: #{tpu_custom_call.1} parent=71 // pred_check
          %p572 = pneg %p288
        $region118: #{tpu_custom_call.1} parent=71 // pred_check_branch
          %574 = sbr.rel (%p572) target = $region120
        $region119: #{tpu_custom_call.1} parent=71 // pred_region
          %575 = dma.done [#allocation21], 16
        $region120: #{tpu_custom_call.1} parent=71 // pred_fallthru
          _
        // Predicated region
        $region121: #{tpu_custom_call.1} parent=71 // pred_check
          %p576 = pneg %p309
        $region122: #{tpu_custom_call.1} parent=71 // pred_check_branch
          %578 = sbr.rel (%p576) target = $region124
        $region123: #{tpu_custom_call.1} parent=71 // pred_region
          %579 = dma.done [#allocation21], 16
        $region124: #{tpu_custom_call.1} parent=71 // pred_fallthru
          _
        %s580 = sand.u32 %s44, 1
        %s581 = scalar_lea.sflag [#allocation3], %s580
        %s582 = sand.u32 %s44, 1
        %s583 = smul.addr %s582, 8
        %s584 = scalar_lea.vmem [#allocation2], %s583
        %p585 = pneg %p57
        %p586 = pneg %p54
        %p587 = pneg %p78
        %p588 = pneg %p75
        %p589 = pneg %p99
        %p590 = pneg %p96
        %p591 = pneg %p120
        %p592 = pneg %p117
        %p593 = pneg %p141
        %p594 = pneg %p138
        %p595 = pneg %p162
        %p596 = pneg %p159
        %p597 = pneg %p183
        %p598 = pneg %p180
        %p599 = pneg %p204
        %p600 = pneg %p201
        %p601 = pneg %p225
        %p602 = pneg %p222
        %p603 = pneg %p246
        %p604 = pneg %p243
        %p605 = pneg %p267
        %p606 = pneg %p264
        %p607 = pneg %p288
        %p608 = pneg %p285
        %p609 = pneg %p309
        %p610 = pneg %p306
        %p611 = pneg %p335
        %p612 = pneg %p332
        %s613 = sand.u32 %s322, 1
        %s614 = scalar_lea.sflag [#allocation4], %s613
        %s615 = sand.u32 %s322, 1
        %s616 = smul.addr %s615, 8
        %s617 = scalar_lea.vmem [#allocation23], %s616
        %v619 = vld [vmem:[%s527] sm:$0xff]
        %v620 = vpack.c.bf16 %v619, %v619
        %v621 = vld [vmem:[#allocation5] sm:$0xf]
        %v622 = vld [vmem:[#allocation5 + $0x4] sm:$0xf]
        %v623 = vld [vmem:[#allocation5 + $0x8] sm:$0xf]
        %v624 = vld [vmem:[#allocation5 + $0xc] sm:$0xf]
        %v629 = vunpack.c.l.b16 %v621
        %v630 = vunpack.c.l.b16 %v622
        %v631 = vunpack.c.l.b16 %v623
        %v632 = vunpack.c.l.b16 %v624
        %v633 = vpack.c.b16 %v630, %v629
        %v634 = vpack.c.b16 %v632, %v631
        %vm637 = vcmask 261120
        %v639 = vsel %vm637, %v620, 0
        %641 = vmatprep.subr.bf16.mxu0 0
        %642 = vmatpush1.bf16.msra.mxu0 %v633
        %643 = vmatprep.subr.bf16.mxu0 0
        %644 = vmatpush1.bf16.msra.mxu0 %v634
        %645 = vmatprep.subr.bf16.mxu0 0
        %646 = vmatpush1.bf16.msra.mxu0 0
        %647 = vmatprep.subr.bf16.mxu0 0
        %648 = vmatpush1.bf16.msra.mxu0 0
        %649 = vmatprep.subr.bf16.mxu0 0
        %650 = vmatpush1.bf16.msra.mxu0 0
        %651 = vmatprep.subr.bf16.mxu0 0
        %652 = vmatpush1.bf16.msra.mxu0 0
        %653 = vmatprep.subr.bf16.mxu0 0
        %654 = vmatpush1.bf16.msra.mxu0 0
        %655 = vmatprep.subr.bf16.mxu0 0
        %656 = vmatpush1.bf16.msra.mxu0 0
        %657 = vmatprep.subr.bf16.mxu0 0
        %658 = vmatpush1.bf16.msra.mxu0 0
        %659 = vmatprep.subr.bf16.mxu0 0
        %660 = vmatpush1.bf16.msra.mxu0 0
        %661 = vmatprep.subr.bf16.mxu0 0
        %662 = vmatpush1.bf16.msra.mxu0 0
        %663 = vmatprep.subr.bf16.mxu0 0
        %664 = vmatpush1.bf16.msra.mxu0 0
        %665 = vmatprep.subr.bf16.mxu0 0
        %666 = vmatpush1.bf16.msra.mxu0 0
        %667 = vmatprep.subr.bf16.mxu0 0
        %668 = vmatpush1.bf16.msra.mxu0 0
        %669 = vmatprep.subr.bf16.mxu0 0
        %670 = vmatpush1.bf16.msra.mxu0 0
        %671 = vmatprep.subr.bf16.mxu0 0
        %672 = vmatpush1.bf16.msra.mxu0 0
        %673 = vmatprep.mubr.bf16.mxu0 0
        %674 = vmatmul.mubr.bf16.gmra.mrb[0].mxu0 %v639
        %v675 = vpop.f32.mrb[0].mxu0
        %v676 = vadd.f32 0.0, %v675
        %v677 = vpop.f32.mrb[0].mxu0
        %v678 = vpop.f32.mrb[0].mxu0
        %v679 = vpop.f32.mrb[0].mxu0
        %680 = vdwg.mxu0
        %v681 = vmul.f32 %v676, 0.17677669
        %v682 = vld [vmem:[#allocation7] sm:$0xf]
        %v683 = vld [vmem:[#allocation7 + $0x4] sm:$0xf]
        %v684 = vld [vmem:[#allocation7 + $0x8] sm:$0xf]
        %v685 = vld [vmem:[#allocation7 + $0xc] sm:$0xf]
        %v690 = vunpack.c.l.b16 %v682
        %v691 = vunpack.c.l.b16 %v683
        %v692 = vunpack.c.l.b16 %v684
        %v693 = vunpack.c.l.b16 %v685
        %v694 = vpack.c.b16 %v691, %v690
        %v695 = vpack.c.b16 %v693, %v692
        %698 = vmatprep.subr.bf16.mxu0 0
        %699 = vmatpush1.bf16.msra.mxu0 %v694
        %700 = vmatprep.subr.bf16.mxu0 0
        %701 = vmatpush1.bf16.msra.mxu0 %v695
        %702 = vmatprep.subr.bf16.mxu0 0
        %703 = vmatpush1.bf16.msra.mxu0 0
        %704 = vmatprep.subr.bf16.mxu0 0
        %705 = vmatpush1.bf16.msra.mxu0 0
        %706 = vmatprep.subr.bf16.mxu0 0
        %707 = vmatpush1.bf16.msra.mxu0 0
        %708 = vmatprep.subr.bf16.mxu0 0
        %709 = vmatpush1.bf16.msra.mxu0 0
        %710 = vmatprep.subr.bf16.mxu0 0
        %711 = vmatpush1.bf16.msra.mxu0 0
        %712 = vmatprep.subr.bf16.mxu0 0
        %713 = vmatpush1.bf16.msra.mxu0 0
        %714 = vmatprep.subr.bf16.mxu0 0
        %715 = vmatpush1.bf16.msra.mxu0 0
        %716 = vmatprep.subr.bf16.mxu0 0
        %717 = vmatpush1.bf16.msra.mxu0 0
        %718 = vmatprep.subr.bf16.mxu0 0
        %719 = vmatpush1.bf16.msra.mxu0 0
        %720 = vmatprep.subr.bf16.mxu0 0
        %721 = vmatpush1.bf16.msra.mxu0 0
        %722 = vmatprep.subr.bf16.mxu0 0
        %723 = vmatpush1.bf16.msra.mxu0 0
        %724 = vmatprep.subr.bf16.mxu0 0
        %725 = vmatpush1.bf16.msra.mxu0 0
        %726 = vmatprep.subr.bf16.mxu0 0
        %727 = vmatpush1.bf16.msra.mxu0 0
        %728 = vmatprep.subr.bf16.mxu0 0
        %729 = vmatpush1.bf16.msra.mxu0 0
        %730 = vmatprep.mubr.bf16.mxu0 0
        %731 = vmatmul.mubr.bf16.gmra.mrb[0].mxu0 %v639
        %v732 = vpop.f32.mrb[0].mxu0
        %v733 = vadd.f32 0.0, %v732
        %v734 = vpop.f32.mrb[0].mxu0
        %v735 = vpop.f32.mrb[0].mxu0
        %v736 = vpop.f32.mrb[0].mxu0
        %737 = vdwg.mxu0
        %v738 = vld [vmem:[#allocation8] sm:$0xf]
        %v739 = vld [vmem:[#allocation8 + $0x4] sm:$0xf]
        %v740 = vld [vmem:[#allocation8 + $0x8] sm:$0xf]
        %v741 = vld [vmem:[#allocation8 + $0xc] sm:$0xf]
        %v746 = vunpack.c.l.b16 %v738
        %v747 = vunpack.c.l.b16 %v739
        %v748 = vunpack.c.l.b16 %v740
        %v749 = vunpack.c.l.b16 %v741
        %v750 = vpack.c.b16 %v747, %v746
        %v751 = vpack.c.b16 %v749, %v748
        %754 = vmatprep.subr.bf16.mxu0 0
        %755 = vmatpush1.bf16.msra.mxu0 %v750
        %756 = vmatprep.subr.bf16.mxu0 0
        %757 = vmatpush1.bf16.msra.mxu0 %v751
        %758 = vmatprep.subr.bf16.mxu0 0
        %759 = vmatpush1.bf16.msra.mxu0 0
        %760 = vmatprep.subr.bf16.mxu0 0
        %761 = vmatpush1.bf16.msra.mxu0 0
        %762 = vmatprep.subr.bf16.mxu0 0
        %763 = vmatpush1.bf16.msra.mxu0 0
        %764 = vmatprep.subr.bf16.mxu0 0
        %765 = vmatpush1.bf16.msra.mxu0 0
        %766 = vmatprep.subr.bf16.mxu0 0
        %767 = vmatpush1.bf16.msra.mxu0 0
        %768 = vmatprep.subr.bf16.mxu0 0
        %769 = vmatpush1.bf16.msra.mxu0 0
        %770 = vmatprep.subr.bf16.mxu0 0
        %771 = vmatpush1.bf16.msra.mxu0 0
        %772 = vmatprep.subr.bf16.mxu0 0
        %773 = vmatpush1.bf16.msra.mxu0 0
        %774 = vmatprep.subr.bf16.mxu0 0
        %775 = vmatpush1.bf16.msra.mxu0 0
        %776 = vmatprep.subr.bf16.mxu0 0
        %777 = vmatpush1.bf16.msra.mxu0 0
        %778 = vmatprep.subr.bf16.mxu0 0
        %779 = vmatpush1.bf16.msra.mxu0 0
        %780 = vmatprep.subr.bf16.mxu0 0
        %781 = vmatpush1.bf16.msra.mxu0 0
        %782 = vmatprep.subr.bf16.mxu0 0
        %783 = vmatpush1.bf16.msra.mxu0 0
        %784 = vmatprep.subr.bf16.mxu0 0
        %785 = vmatpush1.bf16.msra.mxu0 0
        %786 = vmatprep.mubr.bf16.mxu0 0
        %787 = vmatmul.mubr.bf16.gmra.mrb[0].mxu0 %v639
        %v788 = vpop.f32.mrb[0].mxu0
        %v789 = vadd.f32 0.0, %v788
        %v790 = vpop.f32.mrb[0].mxu0
        %v791 = vpop.f32.mrb[0].mxu0
        %v792 = vpop.f32.mrb[0].mxu0
        %793 = vdwg.mxu0
        %v794 = vpack.c.bf16 %v681, %v681
        %v795 = vpack.c.bf16 %v733, %v733
        %v796 = vpack.c.bf16 %v789, %v789
        %v798 = vsel %vm637, %v794, 0
        %v801 = vsel %vm637, %v795, 0
        %803 = vmatprep.subr.bf16.mxu0 0
        %804 = vmatpush1.bf16.xpose.msra.mxu0 %v801
        %805 = vmatprep.subr.bf16.mxu0 0
        %806 = vmatpush1.bf16.xpose.msra.mxu0 0
        %807 = vmatprep.subr.bf16.mxu0 0
        %808 = vmatpush1.bf16.xpose.msra.mxu0 0
        %809 = vmatprep.subr.bf16.mxu0 0
        %810 = vmatpush1.bf16.xpose.msra.mxu0 0
        %811 = vmatprep.subr.bf16.mxu0 0
        %812 = vmatpush1.bf16.xpose.msra.mxu0 0
        %813 = vmatprep.subr.bf16.mxu0 0
        %814 = vmatpush1.bf16.xpose.msra.mxu0 0
        %815 = vmatprep.subr.bf16.mxu0 0
        %816 = vmatpush1.bf16.xpose.msra.mxu0 0
        %817 = vmatprep.subr.bf16.mxu0 0
        %818 = vmatpush1.bf16.xpose.msra.mxu0 0
        %819 = vmatprep.subr.bf16.mxu0 0
        %820 = vmatpush1.bf16.xpose.msra.mxu0 0
        %821 = vmatprep.subr.bf16.mxu0 0
        %822 = vmatpush1.bf16.xpose.msra.mxu0 0
        %823 = vmatprep.subr.bf16.mxu0 0
        %824 = vmatpush1.bf16.xpose.msra.mxu0 0
        %825 = vmatprep.subr.bf16.mxu0 0
        %826 = vmatpush1.bf16.xpose.msra.mxu0 0
        %827 = vmatprep.subr.bf16.mxu0 0
        %828 = vmatpush1.bf16.xpose.msra.mxu0 0
        %829 = vmatprep.subr.bf16.mxu0 0
        %830 = vmatpush1.bf16.xpose.msra.mxu0 0
        %831 = vmatprep.subr.bf16.mxu0 0
        %832 = vmatpush1.bf16.xpose.msra.mxu0 0
        %833 = vmatprep.subr.bf16.mxu0 0
        %834 = vmatpush1.bf16.xpose.msra.mxu0 0
        %835 = vmatprep.mubr.bf16.mxu0 0
        %836 = vmatmul.mubr.bf16.gmra.mrb[0].mxu0 %v798
        %v837 = vpop.f32.mrb[0].mxu0
        %v838 = vadd.f32 0.0, %v837
        %v839 = vpop.f32.mrb[0].mxu0
        %v840 = vpop.f32.mrb[0].mxu0
        %v841 = vpop.f32.mrb[0].mxu0
        %842 = vdwg.mxu0
        %vm843 = vcmask 64512
        %v844 = vsel %vm843, %v838, -inf
        %845 = vmax.xlane.f32.xlu0 %v844
        %v846 = vpop.xlane.xlu0 %845
        %v847 = vsub.f32 %v838, %v846
        %v848 = vmul.f32 %v847, 1.442695
        %v849 = vpow.pop %v848
        %v850 = vsel %vm843, %v849, 0.0
        %851 = vadd.xlane.f32.xlu0 %v850
        %v852 = vpop.xlane.xlu0 %851
        %v853 = vrcp.pop %v852
        %v854 = vmul.f32 %v849, %v853
        %v855 = vpack.c.bf16 %v854, %v854
        %v857 = vsel %vm843, %v855, 0
        %vm859 = vcmask 1043456
        %v861 = vsel %vm859, %v796, 0
        %863 = vmatprep.subr.bf16.mxu0 0
        %864 = vmatpush1.bf16.msra.mxu0 %v861
        %865 = vmatprep.subr.bf16.mxu0 0
        %866 = vmatpush1.bf16.msra.mxu0 0
        %867 = vmatprep.subr.bf16.mxu0 0
        %868 = vmatpush1.bf16.msra.mxu0 0
        %869 = vmatprep.subr.bf16.mxu0 0
        %870 = vmatpush1.bf16.msra.mxu0 0
        %871 = vmatprep.subr.bf16.mxu0 0
        %872 = vmatpush1.bf16.msra.mxu0 0
        %873 = vmatprep.subr.bf16.mxu0 0
        %874 = vmatpush1.bf16.msra.mxu0 0
        %875 = vmatprep.subr.bf16.mxu0 0
        %876 = vmatpush1.bf16.msra.mxu0 0
        %877 = vmatprep.subr.bf16.mxu0 0
        %878 = vmatpush1.bf16.msra.mxu0 0
        %879 = vmatprep.subr.bf16.mxu0 0
        %880 = vmatpush1.bf16.msra.mxu0 0
        %881 = vmatprep.subr.bf16.mxu0 0
        %882 = vmatpush1.bf16.msra.mxu0 0
        %883 = vmatprep.subr.bf16.mxu0 0
        %884 = vmatpush1.bf16.msra.mxu0 0
        %885 = vmatprep.subr.bf16.mxu0 0
        %886 = vmatpush1.bf16.msra.mxu0 0
        %887 = vmatprep.subr.bf16.mxu0 0
        %888 = vmatpush1.bf16.msra.mxu0 0
        %889 = vmatprep.subr.bf16.mxu0 0
        %890 = vmatpush1.bf16.msra.mxu0 0
        %891 = vmatprep.subr.bf16.mxu0 0
        %892 = vmatpush1.bf16.msra.mxu0 0
        %893 = vmatprep.subr.bf16.mxu0 0
        %894 = vmatpush1.bf16.msra.mxu0 0
        %895 = vmatprep.mubr.bf16.mxu0 0
        %896 = vmatmul.mubr.bf16.gmra.mrb[0].mxu0 %v857
        %v897 = vpop.f32.mrb[0].mxu0
        %v898 = vadd.f32 0.0, %v897
        %v899 = vpop.f32.mrb[0].mxu0
        %v900 = vpop.f32.mrb[0].mxu0
        %v901 = vpop.f32.mrb[0].mxu0
        %902 = vdwg.mxu0
        %v903 = vpack.c.bf16 %v898, %v898
        %v904 = vld [vmem:[#allocation10] sm:$0xf]
        %v905 = vld [vmem:[#allocation10 + $0x4] sm:$0xf]
        %v906 = vld [vmem:[#allocation10 + $0x8] sm:$0xf]
        %v907 = vld [vmem:[#allocation10 + $0xc] sm:$0xf]
        %909 = vrot.lane.b32.xlu0 %v794, 96
        %v910 = vpop.permute.xlu0 %909
        %912 = vrot.lane.b32.xlu0 %v795, 96
        %v913 = vpop.permute.xlu0 %912
        %v915 = vsel %vm637, %v910, 0
        %v918 = vsel %vm637, %v913, 0
        %920 = vmatprep.subr.bf16.mxu0 0
        %921 = vmatpush1.bf16.xpose.msra.mxu0 %v918
        %922 = vmatprep.subr.bf16.mxu0 0
        %923 = vmatpush1.bf16.xpose.msra.mxu0 0
        %924 = vmatprep.subr.bf16.mxu0 0
        %925 = vmatpush1.bf16.xpose.msra.mxu0 0
        %926 = vmatprep.subr.bf16.mxu0 0
        %927 = vmatpush1.bf16.xpose.msra.mxu0 0
        %928 = vmatprep.subr.bf16.mxu0 0
        %929 = vmatpush1.bf16.xpose.msra.mxu0 0
        %930 = vmatprep.subr.bf16.mxu0 0
        %931 = vmatpush1.bf16.xpose.msra.mxu0 0
        %932 = vmatprep.subr.bf16.mxu0 0
        %933 = vmatpush1.bf16.xpose.msra.mxu0 0
        %934 = vmatprep.subr.bf16.mxu0 0
        %935 = vmatpush1.bf16.xpose.msra.mxu0 0
        %936 = vmatprep.subr.bf16.mxu0 0
        %937 = vmatpush1.bf16.xpose.msra.mxu0 0
        %938 = vmatprep.subr.bf16.mxu0 0
        %939 = vmatpush1.bf16.xpose.msra.mxu0 0
        %940 = vmatprep.subr.bf16.mxu0 0
        %941 = vmatpush1.bf16.xpose.msra.mxu0 0
        %942 = vmatprep.subr.bf16.mxu0 0
        %943 = vmatpush1.bf16.xpose.msra.mxu0 0
        %944 = vmatprep.subr.bf16.mxu0 0
        %945 = vmatpush1.bf16.xpose.msra.mxu0 0
        %946 = vmatprep.subr.bf16.mxu0 0
        %947 = vmatpush1.bf16.xpose.msra.mxu0 0
        %948 = vmatprep.subr.bf16.mxu0 0
        %949 = vmatpush1.bf16.xpose.msra.mxu0 0
        %950 = vmatprep.subr.bf16.mxu0 0
        %951 = vmatpush1.bf16.xpose.msra.mxu0 0
        %952 = vmatprep.mubr.bf16.mxu0 0
        %953 = vmatmul.mubr.bf16.gmra.mrb[0].mxu0 %v915
        %v954 = vpop.f32.mrb[0].mxu0
        %v955 = vadd.f32 0.0, %v954
        %v956 = vpop.f32.mrb[0].mxu0
        %v957 = vpop.f32.mrb[0].mxu0
        %v958 = vpop.f32.mrb[0].mxu0
        %959 = vdwg.mxu0
        %v960 = vsel %vm843, %v955, -inf
        %961 = vmax.xlane.f32.xlu0 %v960
        %v962 = vpop.xlane.xlu0 %961
        %v963 = vsub.f32 %v955, %v962
        %v964 = vmul.f32 %v963, 1.442695
        %v965 = vpow.pop %v964
        %v966 = vsel %vm843, %v965, 0.0
        %967 = vadd.xlane.f32.xlu0 %v966
        %v968 = vpop.xlane.xlu0 %967
        %v969 = vrcp.pop %v968
        %v970 = vmul.f32 %v965, %v969
        %v971 = vpack.c.bf16 %v970, %v970
        %973 = vrot.lane.b32.xlu0 %v796, 96
        %v974 = vpop.permute.xlu0 %973
        %v976 = vsel %vm843, %v971, 0
        %v979 = vsel %vm859, %v974, 0
        %981 = vmatprep.subr.bf16.mxu0 0
        %982 = vmatpush1.bf16.msra.mxu0 %v979
        %983 = vmatprep.subr.bf16.mxu0 0
        %984 = vmatpush1.bf16.msra.mxu0 0
        %985 = vmatprep.subr.bf16.mxu0 0
        %986 = vmatpush1.bf16.msra.mxu0 0
        %987 = vmatprep.subr.bf16.mxu0 0
        %988 = vmatpush1.bf16.msra.mxu0 0
        %989 = vmatprep.subr.bf16.mxu0 0
        %990 = vmatpush1.bf16.msra.mxu0 0
        %991 = vmatprep.subr.bf16.mxu0 0
        %992 = vmatpush1.bf16.msra.mxu0 0
        %993 = vmatprep.subr.bf16.mxu0 0
        %994 = vmatpush1.bf16.msra.mxu0 0
        %995 = vmatprep.subr.bf16.mxu0 0
        %996 = vmatpush1.bf16.msra.mxu0 0
        %997 = vmatprep.subr.bf16.mxu0 0
        %998 = vmatpush1.bf16.msra.mxu0 0
        %999 = vmatprep.subr.bf16.mxu0 0
        %1000 = vmatpush1.bf16.msra.mxu0 0
        %1001 = vmatprep.subr.bf16.mxu0 0
        %1002 = vmatpush1.bf16.msra.mxu0 0
        %1003 = vmatprep.subr.bf16.mxu0 0
        %1004 = vmatpush1.bf16.msra.mxu0 0
        %1005 = vmatprep.subr.bf16.mxu0 0
        %1006 = vmatpush1.bf16.msra.mxu0 0
        %1007 = vmatprep.subr.bf16.mxu0 0
        %1008 = vmatpush1.bf16.msra.mxu0 0
        %1009 = vmatprep.subr.bf16.mxu0 0
        %1010 = vmatpush1.bf16.msra.mxu0 0
        %1011 = vmatprep.subr.bf16.mxu0 0
        %1012 = vmatpush1.bf16.msra.mxu0 0
        %1013 = vmatprep.mubr.bf16.mxu0 0
        %1014 = vmatmul.mubr.bf16.gmra.mrb[0].mxu0 %v976
        %v1015 = vpop.f32.mrb[0].mxu0
        %v1016 = vadd.f32 0.0, %v1015
        %v1017 = vpop.f32.mrb[0].mxu0
        %v1018 = vpop.f32.mrb[0].mxu0
        %v1019 = vpop.f32.mrb[0].mxu0
        %1020 = vdwg.mxu0
        %v1021 = vpack.c.bf16 %v1016, %v1016
        %v1022 = vld [vmem:[#allocation10 + $0x10] sm:$0xf]
        %v1023 = vld [vmem:[#allocation10 + $0x14] sm:$0xf]
        %v1024 = vld [vmem:[#allocation10 + $0x18] sm:$0xf]
        %v1025 = vld [vmem:[#allocation10 + $0x1c] sm:$0xf]
        %v1030 = vunpack.c.l.b16 %v1022
        %v1031 = vunpack.c.l.b16 %v1023
        %v1032 = vunpack.c.l.b16 %v1024
        %v1033 = vunpack.c.l.b16 %v1025
        %v1034 = vpack.c.b16 %v1031, %v1030
        %v1035 = vpack.c.b16 %v1033, %v1032
        %v1039 = vsel %vm637, %v1021, 0
        %1041 = vmatprep.subr.bf16.mxu0 0
        %1042 = vmatpush1.bf16.msra.mxu0 %v1034
        %1043 = vmatprep.subr.bf16.mxu0 0
        %1044 = vmatpush1.bf16.msra.mxu0 %v1035
        %1045 = vmatprep.subr.bf16.mxu0 0
        %1046 = vmatpush1.bf16.msra.mxu0 0
        %1047 = vmatprep.subr.bf16.mxu0 0
        %1048 = vmatpush1.bf16.msra.mxu0 0
        %1049 = vmatprep.subr.bf16.mxu0 0
        %1050 = vmatpush1.bf16.msra.mxu0 0
        %1051 = vmatprep.subr.bf16.mxu0 0
        %1052 = vmatpush1.bf16.msra.mxu0 0
        %1053 = vmatprep.subr.bf16.mxu0 0
        %1054 = vmatpush1.bf16.msra.mxu0 0
        %1055 = vmatprep.subr.bf16.mxu0 0
        %1056 = vmatpush1.bf16.msra.mxu0 0
        %1057 = vmatprep.subr.bf16.mxu0 0
        %1058 = vmatpush1.bf16.msra.mxu0 0
        %1059 = vmatprep.subr.bf16.mxu0 0
        %1060 = vmatpush1.bf16.msra.mxu0 0
        %1061 = vmatprep.subr.bf16.mxu0 0
        %1062 = vmatpush1.bf16.msra.mxu0 0
        %1063 = vmatprep.subr.bf16.mxu0 0
        %1064 = vmatpush1.bf16.msra.mxu0 0
        %1065 = vmatprep.subr.bf16.mxu0 0
        %1066 = vmatpush1.bf16.msra.mxu0 0
        %1067 = vmatprep.subr.bf16.mxu0 0
        %1068 = vmatpush1.bf16.msra.mxu0 0
        %1069 = vmatprep.subr.bf16.mxu0 0
        %1070 = vmatpush1.bf16.msra.mxu0 0
        %1071 = vmatprep.subr.bf16.mxu0 0
        %1072 = vmatpush1.bf16.msra.mxu0 0
        %1073 = vmatprep.mubr.bf16.mxu0 0
        %1074 = vmatmul.mubr.bf16.gmra.mrb[0].mxu0 %v1039
        %v1075 = vpop.f32.mrb[0].mxu0
        %v1076 = vadd.f32 0.0, %v1075
        %v1077 = vpop.f32.mrb[0].mxu0
        %v1078 = vpop.f32.mrb[0].mxu0
        %v1079 = vpop.f32.mrb[0].mxu0
        %1080 = vdwg.mxu0
        %v1085 = vunpack.c.l.b16 %v904
        %v1086 = vunpack.c.l.b16 %v905
        %v1087 = vunpack.c.l.b16 %v906
        %v1088 = vunpack.c.l.b16 %v907
        %v1089 = vpack.c.b16 %v1086, %v1085
        %v1090 = vpack.c.b16 %v1088, %v1087
        %v1094 = vsel %vm637, %v903, 0
        %1096 = vmatprep.subr.bf16.mxu0 0
        %1097 = vmatpush1.bf16.msra.mxu0 %v1089
        %1098 = vmatprep.subr.bf16.mxu0 0
        %1099 = vmatpush1.bf16.msra.mxu0 %v1090
        %1100 = vmatprep.subr.bf16.mxu0 0
        %1101 = vmatpush1.bf16.msra.mxu0 0
        %1102 = vmatprep.subr.bf16.mxu0 0
        %1103 = vmatpush1.bf16.msra.mxu0 0
        %1104 = vmatprep.subr.bf16.mxu0 0
        %1105 = vmatpush1.bf16.msra.mxu0 0
        %1106 = vmatprep.subr.bf16.mxu0 0
        %1107 = vmatpush1.bf16.msra.mxu0 0
        %1108 = vmatprep.subr.bf16.mxu0 0
        %1109 = vmatpush1.bf16.msra.mxu0 0
        %1110 = vmatprep.subr.bf16.mxu0 0
        %1111 = vmatpush1.bf16.msra.mxu0 0
        %1112 = vmatprep.subr.bf16.mxu0 0
        %1113 = vmatpush1.bf16.msra.mxu0 0
        %1114 = vmatprep.subr.bf16.mxu0 0
        %1115 = vmatpush1.bf16.msra.mxu0 0
        %1116 = vmatprep.subr.bf16.mxu0 0
        %1117 = vmatpush1.bf16.msra.mxu0 0
        %1118 = vmatprep.subr.bf16.mxu0 0
        %1119 = vmatpush1.bf16.msra.mxu0 0
        %1120 = vmatprep.subr.bf16.mxu0 0
        %1121 = vmatpush1.bf16.msra.mxu0 0
        %1122 = vmatprep.subr.bf16.mxu0 0
        %1123 = vmatpush1.bf16.msra.mxu0 0
        %1124 = vmatprep.subr.bf16.mxu0 0
        %1125 = vmatpush1.bf16.msra.mxu0 0
        %1126 = vmatprep.subr.bf16.mxu0 0
        %1127 = vmatpush1.bf16.msra.mxu0 0
        %1128 = vmatprep.mubr.bf16.mxu0 0
        %1129 = vmatmul.mubr.bf16.gmra.mrb[0].mxu0 %v1094
        %v1130 = vpop.f32.mrb[0].mxu0
        %v1131 = vadd.f32 %v1076, %v1130
        %v1132 = vpop.f32.mrb[0].mxu0
        %v1133 = vpop.f32.mrb[0].mxu0
        %v1134 = vpop.f32.mrb[0].mxu0
        %1135 = vdwg.mxu0
        %v1136 = vadd.f32 %v619, %v1131
        %v1137 = vsel %vm637, %v1136, 0.0
        %1138 = vadd.xlane.f32.xlu0 %v1137
        %v1139 = vpop.xlane.xlu0 %1138
        %v1140 = vrcp.pop 32.0
        %v1141 = vmul.f32 %v1139, %v1140
        %v1142 = vsub.f32 %v1136, %v1141
        %v1143 = vmul.f32 %v1142, %v1142
        %v1144 = vsel %vm637, %v1143, 0.0
        %1145 = vadd.xlane.f32.xlu0 %v1144
        %v1146 = vpop.xlane.xlu0 %1145
        %v1147 = vmul.f32 %v1146, %v1140
        %v1148 = vadd.f32 %v1147, 1e-05
        %v1149 = vrsqrt.pop %v1148
        %v1150 = vmul.f32 %v1142, %v1149
        %v1151 = vld [vmem:[#allocation17] sm:$0x1]
        %v1153 = vlaneseq
        %v1154 = vshrl.u32 %v1153, 7
        %v1155 = vsub.s32 0, %v1154
        %v1156 = vrot.slane %v1151, %v1155
        %v1158 = vmul.f32 %v1150, %v1156
        %v1159 = vld [vmem:[#allocation19] sm:$0x1]
        %v1161 = vlaneseq
        %v1162 = vshrl.u32 %v1161, 7
        %v1163 = vsub.s32 0, %v1162
        %v1164 = vrot.slane %v1159, %v1163
        %v1166 = vadd.f32 %v1158, %v1164
        %v1167 = vpack.c.bf16 %v1166, %v1166
        %v1168 = vld [vmem:[#allocation11] sm:$0xf]
        %v1169 = vld [vmem:[#allocation11 + $0x4] sm:$0xf]
        %v1170 = vld [vmem:[#allocation11 + $0x8] sm:$0xf]
        %v1171 = vld [vmem:[#allocation11 + $0xc] sm:$0xf]
        %v1172 = vld [vmem:[#allocation13] sm:$0x1]
        %v1174 = vlaneseq
        %v1175 = vshrl.u32 %v1174, 7
        %v1176 = vsub.s32 0, %v1175
        %v1177 = vrot.slane %v1172, %v1176
        %v1183 = vunpack.c.l.b16 %v1168
        %v1184 = vunpack.c.l.b16 %v1169
        %v1185 = vunpack.c.l.b16 %v1170
        %v1186 = vunpack.c.l.b16 %v1171
        %v1187 = vpack.c.b16 %v1184, %v1183
        %v1188 = vpack.c.b16 %v1186, %v1185
        %v1192 = vsel %vm637, %v1167, 0
        %1194 = vmatprep.subr.bf16.mxu0 0
        %1195 = vmatpush1.bf16.msra.mxu0 %v1187
        %1196 = vmatprep.subr.bf16.mxu0 0
        %1197 = vmatpush1.bf16.msra.mxu0 %v1188
        %1198 = vmatprep.subr.bf16.mxu0 0
        %1199 = vmatpush1.bf16.msra.mxu0 0
        %1200 = vmatprep.subr.bf16.mxu0 0
        %1201 = vmatpush1.bf16.msra.mxu0 0
        %1202 = vmatprep.subr.bf16.mxu0 0
        %1203 = vmatpush1.bf16.msra.mxu0 0
        %1204 = vmatprep.subr.bf16.mxu0 0
        %1205 = vmatpush1.bf16.msra.mxu0 0
        %1206 = vmatprep.subr.bf16.mxu0 0
        %1207 = vmatpush1.bf16.msra.mxu0 0
        %1208 = vmatprep.subr.bf16.mxu0 0
        %1209 = vmatpush1.bf16.msra.mxu0 0
        %1210 = vmatprep.subr.bf16.mxu0 0
        %1211 = vmatpush1.bf16.msra.mxu0 0
        %1212 = vmatprep.subr.bf16.mxu0 0
        %1213 = vmatpush1.bf16.msra.mxu0 0
        %1214 = vmatprep.subr.bf16.mxu0 0
        %1215 = vmatpush1.bf16.msra.mxu0 0
        %1216 = vmatprep.subr.bf16.mxu0 0
        %1217 = vmatpush1.bf16.msra.mxu0 0
        %1218 = vmatprep.subr.bf16.mxu0 0
        %1219 = vmatpush1.bf16.msra.mxu0 0
        %1220 = vmatprep.subr.bf16.mxu0 0
        %1221 = vmatpush1.bf16.msra.mxu0 0
        %1222 = vmatprep.subr.bf16.mxu0 0
        %1223 = vmatpush1.bf16.msra.mxu0 0
        %1224 = vmatprep.subr.bf16.mxu0 0
        %1225 = vmatpush1.bf16.msra.mxu0 0
        %1226 = vmatprep.mubr.bf16.mxu0 0
        %1227 = vmatmul.mubr.bf16.gmra.mrb[0].mxu0 %v1192
        %v1228 = vpop.f32.mrb[0].mxu0
        %v1229 = vadd.f32 %v1177, %v1228
        %v1230 = vpop.f32.mrb[0].mxu0
        %v1231 = vpop.f32.mrb[0].mxu0
        %v1232 = vpop.f32.mrb[0].mxu0
        %1233 = vdwg.mxu0
        %v1234 = vmax.f32 %v1229, 0.0
        %v1235 = vpack.c.bf16 %v1234, %v1234
        %v1236 = vld [vmem:[#allocation14] sm:$0xf]
        %v1237 = vld [vmem:[#allocation14 + $0x4] sm:$0xf]
        %v1238 = vld [vmem:[#allocation14 + $0x8] sm:$0xf]
        %v1239 = vld [vmem:[#allocation14 + $0xc] sm:$0xf]
        %v1240 = vld [vmem:[#allocation14 + $0x10] sm:$0xf]
        %v1241 = vld [vmem:[#allocation14 + $0x14] sm:$0xf]
        %v1242 = vld [vmem:[#allocation14 + $0x18] sm:$0xf]
        %v1243 = vld [vmem:[#allocation14 + $0x1c] sm:$0xf]
        %v1244 = vld [vmem:[#allocation16] sm:$0x1]
        %v1246 = vlaneseq
        %v1247 = vshrl.u32 %v1246, 7
        %v1248 = vsub.s32 0, %v1247
        %v1249 = vrot.slane %v1244, %v1248
        %v1259 = vunpack.c.l.b16 %v1236
        %v1260 = vunpack.c.l.b16 %v1237
        %v1261 = vunpack.c.l.b16 %v1238
        %v1262 = vunpack.c.l.b16 %v1239
        %v1263 = vunpack.c.l.b16 %v1240
        %v1264 = vunpack.c.l.b16 %v1241
        %v1265 = vunpack.c.l.b16 %v1242
        %v1266 = vunpack.c.l.b16 %v1243
        %v1267 = vpack.c.b16 %v1260, %v1259
        %v1268 = vpack.c.b16 %v1262, %v1261
        %v1269 = vpack.c.b16 %v1264, %v1263
        %v1270 = vpack.c.b16 %v1266, %v1265
        %vm1275 = vcmask 523264
        %v1277 = vsel %vm1275, %v1235, 0
        %1279 = vmatprep.subr.bf16.mxu0 0
        %1280 = vmatpush1.bf16.msra.mxu0 %v1267
        %1281 = vmatprep.subr.bf16.mxu0 0
        %1282 = vmatpush1.bf16.msra.mxu0 %v1268
        %1283 = vmatprep.subr.bf16.mxu0 0
        %1284 = vmatpush1.bf16.msra.mxu0 %v1269
        %1285 = vmatprep.subr.bf16.mxu0 0
        %1286 = vmatpush1.bf16.msra.mxu0 %v1270
        %1287 = vmatprep.subr.bf16.mxu0 0
        %1288 = vmatpush1.bf16.msra.mxu0 0
        %1289 = vmatprep.subr.bf16.mxu0 0
        %1290 = vmatpush1.bf16.msra.mxu0 0
        %1291 = vmatprep.subr.bf16.mxu0 0
        %1292 = vmatpush1.bf16.msra.mxu0 0
        %1293 = vmatprep.subr.bf16.mxu0 0
        %1294 = vmatpush1.bf16.msra.mxu0 0
        %1295 = vmatprep.subr.bf16.mxu0 0
        %1296 = vmatpush1.bf16.msra.mxu0 0
        %1297 = vmatprep.subr.bf16.mxu0 0
        %1298 = vmatpush1.bf16.msra.mxu0 0
        %1299 = vmatprep.subr.bf16.mxu0 0
        %1300 = vmatpush1.bf16.msra.mxu0 0
        %1301 = vmatprep.subr.bf16.mxu0 0
        %1302 = vmatpush1.bf16.msra.mxu0 0
        %1303 = vmatprep.subr.bf16.mxu0 0
        %1304 = vmatpush1.bf16.msra.mxu0 0
        %1305 = vmatprep.subr.bf16.mxu0 0
        %1306 = vmatpush1.bf16.msra.mxu0 0
        %1307 = vmatprep.subr.bf16.mxu0 0
        %1308 = vmatpush1.bf16.msra.mxu0 0
        %1309 = vmatprep.subr.bf16.mxu0 0
        %1310 = vmatpush1.bf16.msra.mxu0 0
        %1311 = vmatprep.mubr.bf16.mxu0 0
        %1312 = vmatmul.mubr.bf16.gmra.mrb[0].mxu0 %v1277
        %v1313 = vpop.f32.mrb[0].mxu0
        %v1314 = vadd.f32 %v1249, %v1313
        %v1315 = vpop.f32.mrb[0].mxu0
        %v1316 = vpop.f32.mrb[0].mxu0
        %v1317 = vpop.f32.mrb[0].mxu0
        %1318 = vdwg.mxu0
        %v1319 = vadd.f32 %v1166, %v1314
        %v1320 = vsel %vm637, %v1319, 0.0
        %1321 = vadd.xlane.f32.xlu0 %v1320
        %v1322 = vpop.xlane.xlu0 %1321
        %v1323 = vmul.f32 %v1322, %v1140
        %v1324 = vsub.f32 %v1319, %v1323
        %v1325 = vmul.f32 %v1324, %v1324
        %v1326 = vsel %vm637, %v1325, 0.0
        %1327 = vadd.xlane.f32.xlu0 %v1326
        %v1328 = vpop.xlane.xlu0 %1327
        %v1329 = vmul.f32 %v1328, %v1140
        %v1330 = vadd.f32 %v1329, 1e-05
        %v1331 = vrsqrt.pop %v1330
        %v1332 = vmul.f32 %v1324, %v1331
        %v1333 = vld [vmem:[#allocation20] sm:$0x1]
        %v1335 = vlaneseq
        %v1336 = vshrl.u32 %v1335, 7
        %v1337 = vsub.s32 0, %v1336
        %v1338 = vrot.slane %v1333, %v1337
        %v1340 = vmul.f32 %v1332, %v1338
        %v1341 = vld [vmem:[#allocation22] sm:$0x1]
        %v1343 = vlaneseq
        %v1344 = vshrl.u32 %v1343, 7
        %v1345 = vsub.s32 0, %v1344
        %v1346 = vrot.slane %v1341, %v1345
        %v1348 = vadd.f32 %v1340, %v1346
        %1349 = vst.msk [vmem:[%s617] sm:$0xff] %vm637, %v1348
        %s1350 = sand.u32 %s322, 1
        %s1351 = scalar_lea.sflag [#allocation4], %s1350
        %s1352 = sand.u32 %s322, 1
        %s1353 = smul.addr %s1352, 8
        %s1354 = scalar_lea.vmem [#allocation23], %s1353
        // Predicated region
        $region125: #{tpu_custom_call.1} parent=71 // pred_check
          %p1355 = pneg %p332
        $region126: #{tpu_custom_call.1} parent=71 // pred_check_branch
          %1357 = sbr.rel (%p1355) target = $region128
        $region127: #{tpu_custom_call.1} parent=71 // pred_region
          %s1359 = ssub.s32 128, 128
          %1360 = vsyncadd %s1351, %s1359
          %s1361 = smul.addr %s36, 128
          %s1362 = scalar_lea.hbm %s13, %s1361
          %s1364 = sshll.u32 %s1354, 4
          %s1365 = int_to_ptr.vmem [resolvable:$true] %s1364
          %1367 = dma.vmem_to_hbm [thread:$0]  %s1365, 128, %s1362, %s1351
        $region128: #{tpu_custom_call.1} parent=71 // pred_fallthru
          _
      $region72: #{tpu_custom_call.1} parent=5 // pred_fallthru
        _
      %p1368 = scmp.le.s32.totalorder 2, %s31
      // Predicated region
      $region129: #{tpu_custom_call.1} parent=5 // pred_check
        %p1369 = pneg %p1368
      $region130: #{tpu_custom_call.1} parent=5 // pred_check_branch
        %1371 = sbr.rel (%p1369) target = $region132
      $region131: #{tpu_custom_call.1} parent=5 // pred_region
        %s1372 = ssub.s32 %s31, 2
        // Predicated region
        $region133: #{tpu_custom_call.1} parent=131 // pred_check
          %p1373 = pneg %p338
        $region134: #{tpu_custom_call.1} parent=131 // pred_check_branch
          %1375 = sbr.rel (%p1373) target = $region136
        $region135: #{tpu_custom_call.1} parent=131 // pred_region
          %s1376 = sand.u32 %s323, 1
          %s1377 = scalar_lea.sflag [#allocation4], %s1376
          %s1378 = sand.u32 %s323, 1
          %s1379 = smul.addr %s1378, 8
          %s1380 = scalar_lea.vmem [#allocation23], %s1379
          %1381 = dma.done %s1377, 128
        $region136: #{tpu_custom_call.1} parent=131 // pred_fallthru
          _
      $region132: #{tpu_custom_call.1} parent=5 // pred_fallthru
        _
    $region6: #{tpu_custom_call.1} parent=1 // loop_footer
      %s35 = sadd.s32 1, %s31
    $region7: #{tpu_custom_call.1} parent=1 // loop_footer_branch
      %30 = sbr.rel target = $region3
    $region8: #{tpu_custom_call.1} parent=1 // loop_exit
      _
    %1382 = vsyncpa [#allocation3], 1
    %s1383 = scalar_lea.sflag [#allocation3], 1
    %1384 = vsyncpa %s1383, 1
    %1385 = vsyncpa [#allocation6], 1
    %1386 = vsyncpa [#allocation9], 1
    %1387 = vsyncpa [#allocation12], 1
    %1388 = vsyncpa [#allocation15], 1
    %1389 = vsyncpa [#allocation18], 1
    %1390 = vsyncpa [#allocation21], 1
    %1391 = vsyncpa [#allocation4], 1
    %s1392 = scalar_lea.sflag [#allocation4], 1
    %1393 = vsyncpa %s1392, 1

</llo_original>
